<compile_context>
chip_gen: v6e
topology: v6e:2x2x1
jax: 0.10.0
libtpu: 0.0.40
codegen_flags: <defaults>
</compile_context>

<pallas_src>
import functools

import jax
import jax.numpy as jnp
from jax import lax
from jax.experimental import pallas as pl
from jax.experimental.pallas import tpu as pltpu


def _round_up(x, m):
    return (x + m - 1) // m * m


def _pick_hw_tile(hw, cap):
    """Largest divisor of hw that is a multiple of 8 and <= cap.

    Falls back to hw itself (a full-extent block is always legal) when no such
    divisor exists, e.g. for awkward feature-map sizes.
    """
    for t in range(min(cap, hw), 7, -1):
        if hw % t == 0 and t % 8 == 0:
            return t
    return hw


def _tpu_generation():
    try:
        kind = jax.devices()[0].device_kind.lower()
    except Exception:
        return "unknown"
    if "v7" in kind:
        return "v7x"
    if "v6" in kind:
        return "v6e"
    if "v5e" in kind or "v5 lite" in kind or "v5lite" in kind:
        return "v5e"
    return "other"


# ----------------------------------------------------------------------------
# Pallas kernel: fused 1x1 conv (matmul) + GroupNorm, HW-tiled accumulate/finalize
# ----------------------------------------------------------------------------
def _input_proj_kernel(x_ref, w_ref, prm_ref, avg_ref, o_ref,
                       sum_acc, stage_ref, *, eps, t_hw):
    # x_ref:     [tHW, CinP]  bf16 pixel tile (channels last, Cin padded >= 128)
    # w_ref:     [CinP, C]    bf16 conv weight slice (padded rows/cols zero)
    # prm_ref:   [3, C]       f32 rows: conv bias, gamma, beta
    # avg_ref:   [C, C]       bf16 block-diagonal group-average matrix (1/gs)
    # o_ref:     [HW, C]      bf16 output block (written only in finalize)
    # sum_acc:   [1, C]       f32 running per-channel sum of x@w
    # stage_ref: [HW, C]      f32 staging of the un-normalized conv output
    t = pl.program_id(2)
    n_t = pl.num_programs(2)

    @pl.when(t == 0)
    def _init():
        sum_acc[...] = jnp.zeros_like(sum_acc)

    # 1x1 conv tile: bf16 MXU matmul with f32 accumulation.  The conv bias is
    # folded into the finalize affine, so the hot loop is matmul + store + sum.
    y = jnp.dot(x_ref[...], w_ref[...], preferred_element_type=jnp.float32)

    row0 = pl.multiple_of(t * t_hw, t_hw)     # t_hw % 8 == 0 -> aligned store
    stage_ref[pl.ds(row0, t_hw), :] = y

    # Cross-sublane per-channel sum on the XLU (keeps the MXU-push slot free
    # for the conv matmul; replaces the previous f32 ones-dot).
    sum_acc[...] += jnp.sum(y, axis=0, keepdims=True)

    @pl.when(t == n_t - 1)
    def _finalize():
        hw = stage_ref.shape[0]
        n_chunks = hw // t_hw
        inv_hw = 1.0 / float(hw)

        bias = prm_ref[0:1, :]
        gamma = prm_ref[1:2, :]
        beta = prm_ref[2:3, :]

        # Group mean of (x@w + b), broadcast back per channel, via one tiny
        # bf16 dot with the block-diagonal 1/gs averaging matrix.
        mean_ch = sum_acc[...] * inv_hw + bias                        # [1, C]
        mean_g = jnp.dot(mean_ch.astype(jnp.bfloat16), avg_ref[...],
                         preferred_element_type=jnp.float32)          # [1, C]
        mu = mean_g - bias        # (x@w + b) - mean_g == x@w - mu

        # Pass 1: two-pass variance, chunked so no full [HW, C] temporary is
        # materialized (bounds vreg live ranges in the serialized tail).
        def _ssq(c, acc):
            off = pl.multiple_of(c * t_hw, t_hw)
            d = stage_ref[pl.ds(off, t_hw), :] - mu
            return acc + jnp.sum(d * d, axis=0, keepdims=True)

        ssq0 = jnp.zeros(sum_acc.shape, jnp.float32)
        if n_chunks <= 8:
            ssq = lax.fori_loop(0, n_chunks, _ssq, ssq0, unroll=True)
        else:
            ssq = lax.fori_loop(0, n_chunks, _ssq, ssq0)

        var_g = jnp.dot((ssq * inv_hw).astype(jnp.bfloat16), avg_ref[...],
                        preferred_element_type=jnp.float32)           # [1, C]
        inv = lax.rsqrt(jnp.maximum(var_g, 0.0) + eps)                # EUP
        scale = inv * gamma
        shift = beta - mu * scale

        # Pass 2: normalize + affine, written chunk-by-chunk as bf16
        # (lane-dense unmasked vst: C is a multiple of 128).
        def _write(c, carry):
            off = pl.multiple_of(c * t_hw, t_hw)
            y_c = stage_ref[pl.ds(off, t_hw), :]
            o_ref[pl.ds(off, t_hw), :] = (y_c * scale + shift).astype(o_ref.dtype)
            return carry

        if n_chunks <= 8:
            lax.fori_loop(0, n_chunks, _write, 0, unroll=True)
        else:
            lax.fori_loop(0, n_chunks, _write, 0)


def input_proj_pallas(x_tokens, w, b, gamma, beta, *, num_groups=32, eps=1e-5,
                      hw_tile_cap=None, channel_splits=None,
                      vmem_limit_bytes=None):
    """self.input_proj = Conv2d(Cin, hidden, 1x1) -> GroupNorm(32, hidden).

    x_tokens: [B, HW, Cin] channels-last tokens (ideally already bf16 from the
              backbone; the cast below is then a no-op).
    w:        [Cin, Cout]  (PyTorch conv weight [Cout, Cin, 1, 1] squeezed + T)
    returns:  [B, HW, Cpad] bf16, channels last.  Cpad = Cout rounded up to a
              multiple of 128 so every store is lane-dense; padded channels are
              exactly zero and are meant to be KEPT by the downstream consumer
              (no post-kernel slice).  For the real model (hidden=256) Cpad==Cout.
    """
    B, HW, Cin = x_tokens.shape
    Cout = w.shape[1]
    assert Cout % num_groups == 0, "GroupNorm requires Cout % num_groups == 0"
    gs = Cout // num_groups

    gen = _tpu_generation()
    if hw_tile_cap is None:
        # v7x: 64 MiB VMEM -> smaller resident budget; v5e/v6e: 128 MiB, where
        # bigger tiles amortize the ~0.35us/step overhead + give larger DMAs.
        hw_tile_cap = {"v7x": 256, "v6e": 1024, "v5e": 1024}.get(gen, 512)
    if vmem_limit_bytes is None:
        vmem_limit_bytes = {"v7x": 48 << 20, "v6e": 96 << 20,
                            "v5e": 96 << 20}.get(gen, 0)

    # Lane-dense output: pad Cout up to a multiple of 128 (zero w/gamma/beta
    # columns keep padded channels exactly zero).
    c_pad = _round_up(max(Cout, 128), 128)
    pc = c_pad - Cout

    # Optional group-aligned channel split so both v7x TensorCores get work at
    # inference batch size 1 (GroupNorm stats never cross the split boundary).
    if channel_splits is None:
        channel_splits = 2 if (gen == "v7x" and B < 2) else 1
    n_c = max(int(channel_splits), 1)
    if n_c > 1 and (c_pad % (128 * n_c) != 0 or (c_pad // n_c) % gs != 0):
        n_c = 1          # split would break lane density or group alignment
    c_blk = c_pad // n_c

    # Tiny-Cin handling: pad the contraction dim up to 128 with zero weight
    # rows (exact).  No-op at the real backbone width (Cin=2048).
    cin_pad = Cin if Cin >= 128 else 128

    w_p = jnp.pad(w.astype(jnp.float32),
                  ((0, cin_pad - Cin), (0, pc))).astype(jnp.bfloat16)
    prm = jnp.stack([jnp.pad(b.astype(jnp.float32), (0, pc)),
                     jnp.pad(gamma.astype(jnp.float32), (0, pc)),
                     jnp.pad(beta.astype(jnp.float32), (0, pc))], axis=0)

    # Block-diagonal group-average matrix (entries 1/gs), stored in bf16: the
    # two finalize stat dots are [1,C]x[C,C] and tolerate bf16; padded rows /
    # cols are zero so padded channels see mean = var = 0.
    gid = jnp.arange(Cout) // gs
    avg = (gid[:, None] == gid[None, :]).astype(jnp.float32) / float(gs)
    avg = jnp.pad(avg, ((0, pc), (0, pc))).astype(jnp.bfloat16)

    # The backbone should emit bf16 channels-last tokens directly; this cast
    # (and the tiny-Cin pad) is then a no-op.
    x_bf = x_tokens.astype(jnp.bfloat16)
    if cin_pad != Cin:
        x_bf = jnp.pad(x_bf, ((0, 0), (0, 0), (0, cin_pad - Cin)))

    t_hw = _pick_hw_tile(HW, hw_tile_cap)
    n_t = HW // t_hw

    kernel = functools.partial(_input_proj_kernel, eps=eps, t_hw=t_hw)

    compiler_kwargs = dict(
        dimension_semantics=("parallel", "parallel", "arbitrary"))
    if vmem_limit_bytes:
        compiler_kwargs["vmem_limit_bytes"] = int(vmem_limit_bytes)

    # TODO(synk): once validated on the target jax build, add
    # pipeline_mode=pl.Buffered(3) to the x spec on v5e (deeper input buffering)
    # and pl.Buffered(1) on the constant-index operands for v7x VMEM headroom;
    # omitted here to keep lowering identical to the known-good configuration.
    out = pl.pallas_call(
        kernel,
        out_shape=jax.ShapeDtypeStruct((B, HW, c_pad), jnp.bfloat16),
        grid_spec=pltpu.PrefetchScalarGridSpec(
            num_scalar_prefetch=0,
            grid=(B, n_c, n_t),
            in_specs=[
                pl.BlockSpec((pl.Squeezed(), t_hw, cin_pad),
                             lambda bi, ci, ti: (bi, ti, 0)),
                pl.BlockSpec((cin_pad, c_blk), lambda bi, ci, ti: (0, ci)),
                pl.BlockSpec((3, c_blk), lambda bi, ci, ti: (0, ci)),
                pl.BlockSpec((c_blk, c_blk), lambda bi, ci, ti: (ci, ci)),
            ],
            out_specs=pl.BlockSpec((pl.Squeezed(), HW, c_blk),
                                   lambda bi, ci, ti: (bi, 0, ci)),
            scratch_shapes=[pltpu.VMEM((1, c_blk), jnp.float32),
                            pltpu.VMEM((HW, c_blk), jnp.float32)],
        ),
        compiler_params=pltpu.CompilerParams(**compiler_kwargs),
    )(x_bf, w_p, prm, avg)
    return out   # [B, HW, c_pad] bf16, channels last (padded layout kept)


# ----------------------------------------------------------------------------
# Pure-JAX references (correctness checks only)
# ----------------------------------------------------------------------------
def input_proj_ref_tokens(x_tokens, w, b, gamma, beta, *, num_groups=32, eps=1e-5):
    y = jnp.einsum('bpc,cd->bpd', x_tokens.astype(jnp.float32),
                   w.astype(jnp.float32),
                   precision=lax.Precision.HIGHEST) + b[None, None, :]
    B, HW, C = y.shape
    yg = y.reshape(B, HW, num_groups, C // num_groups)
    mean = yg.mean(axis=(1, 3), keepdims=True)
    var = jnp.mean((yg - mean) ** 2, axis=(1, 3), keepdims=True)
    yn = ((yg - mean) / jnp.sqrt(var + eps)).reshape(B, HW, C)
    return yn * gamma[None, None, :] + beta[None, None, :]


def input_proj_ref_nchw(src, w, b, gamma, beta, *, num_groups=32, eps=1e-5):
    B, Cin, H, W = src.shape
    Cout = w.shape[1]
    y = jnp.einsum('bchw,cd->bdhw', src, w,
                   precision=lax.Precision.HIGHEST) + b[None, :, None, None]
    yg = y.reshape(B, num_groups, Cout // num_groups, H, W)
    mean = yg.mean(axis=(2, 3, 4), keepdims=True)
    var = jnp.mean((yg - mean) ** 2, axis=(2, 3, 4), keepdims=True)
    yn = ((yg - mean) / jnp.sqrt(var + eps)).reshape(B, Cout, H, W)
    return yn * gamma[None, :, None, None] + beta[None, :, None, None]


# ----------------------------------------------------------------------------
# Pix2Seq forward (inference path), with synthetic backbone / transformer
# ----------------------------------------------------------------------------
def pix2seq_forward(image_nchw, params, *, num_groups=32):
    B, Cin, H, W = image_nchw.shape
    hidden = params["pos_embed"].shape[-1]
    # TODO(synk): the real backbone (backbone.py) is an injected module; the
    # stand-in emits the image directly as channels-last bf16 tokens so the
    # Pallas input_proj reads bf16 with no standalone cast/transpose before it.
    src_tokens = jnp.transpose(image_nchw, (0, 2, 3, 1)) \
                    .reshape(B, H * W, Cin).astype(jnp.bfloat16)
    pos = params["pos_embed"]                     # [B, HW, hidden], channels last

    # mask = torch.zeros_like(mask).bool()
    mask = jnp.zeros((B, H, W), dtype=jnp.bool_)

    # src = self.input_proj(src)   <-- fused Pallas kernel (hot path)
    src = input_proj_pallas(src_tokens, params["conv_w"], params["conv_b"],
                            params["gn_gamma"], params["gn_beta"],
                            num_groups=num_groups)   # [B, HW, Cpad] bf16

    # Keep the padded channel layout downstream: pad the tiny params once
    # instead of slicing/copying the big activation (padded src channels are
    # exactly zero, so the result is unchanged; no-op when Cpad == hidden).
    head_w = params["head_w"]
    c_pad = src.shape[-1]
    if c_pad != hidden:
        pos = jnp.pad(pos, ((0, 0), (0, 0), (0, c_pad - hidden)))
        head_w = jnp.pad(head_w, ((0, 0), (0, c_pad - hidden), (0, 0)))

    # TODO(synk): the real transformer (transformer.py) is an injected module;
    # stand-in pools (src + pos) over tokens and projects to the vocabulary to
    # reproduce the inference output structure {'pred_seq_logits','pred_seq'}.
    feat = jnp.mean(src.astype(jnp.float32) + pos, axis=1)        # [B, Cpad]
    logits = jnp.einsum('bh,shv->bsv', feat, head_w)              # [B, S, V]
    out_seq = jnp.argmax(logits, axis=-1)
    _ = mask
    return {"pred_seq_logits": logits, "pred_seq": out_seq}


# ----------------------------------------------------------------------------
if __name__ == "__main__":
    key = jax.random.PRNGKey(0)
    B, Cin, H, W = 2, 4, 16, 16          # backbone.num_channels = 4 (toy)
    hidden = 256                         # transformer.d_model (real Pix2Seq value;
                                         # multiple of 32 and 128 -> no channel pad)
    num_groups = 32
    num_classes, num_bins, num_seq = 4, 16, 8
    num_vocal = num_bins + num_classes + 2
    HW = H * W

    ks = jax.random.split(key, 8)
    image = jax.random.normal(ks[0], (B, Cin, H, W), jnp.float32)

    params = {
        # conv weight stored as [Cin, Cout] (PyTorch [Cout, Cin, 1, 1] squeezed+T)
        "conv_w": jax.random.normal(ks[1], (Cin, hidden), jnp.float32) * 0.1,
        "conv_b": jax.random.normal(ks[2], (hidden,), jnp.float32) * 0.1,
        "gn_gamma": 1.0 + 0.1 * jax.random.normal(ks[3], (hidden,), jnp.float32),
        "gn_beta": 0.1 * jax.random.normal(ks[4], (hidden,), jnp.float32),
        "pos_embed": jax.random.normal(ks[5], (B, HW, hidden), jnp.float32) * 0.02,
        "head_w": jax.random.normal(ks[6], (num_seq, hidden, num_vocal),
                                    jnp.float32) * 0.05,
    }

    x_tokens = jnp.transpose(image, (0, 2, 3, 1)).reshape(B, HW, Cin)

    def max_rel(a, b):
        a = a.astype(jnp.float32)
        b = b.astype(jnp.float32)
        return jnp.max(jnp.abs(a - b) / (1.0 + jnp.abs(b)))

    # 1) Kernel vs bf16-matmul-matched channels-last reference.  Covers the
    #    single-tile, multi-tile accumulate, and 2-way channel-split paths.
    ref_bf16 = input_proj_ref_tokens(
        x_tokens.astype(jnp.bfloat16), params["conv_w"].astype(jnp.bfloat16),
        params["conv_b"], params["gn_gamma"], params["gn_beta"],
        num_groups=num_groups)
    run = functools.partial(input_proj_pallas, x_tokens, params["conv_w"],
                            params["conv_b"], params["gn_gamma"],
                            params["gn_beta"], num_groups=num_groups)
    got_1 = run(channel_splits=1)                     # 1 HW tile
    got_4 = run(channel_splits=1, hw_tile_cap=64)     # 4 HW tiles
    got_s = run(channel_splits=2, hw_tile_cap=64)     # 2 channel halves x 4 tiles
    got_1, got_4, got_s, ref_bf16 = jax.block_until_ready(
        (got_1, got_4, got_s, ref_bf16))
    # bf16 output + bf16 group-stat dots -> <= ~0.6% relative error budget.
    assert max_rel(got_1, ref_bf16) < 1e-2, "single-tile mismatch"
    assert max_rel(got_4, ref_bf16) < 1e-2, "multi-tile mismatch"
    assert max_rel(got_s, ref_bf16) < 1e-2, "channel-split mismatch"

    # 2) Padded-channel path (hidden=64 -> Cpad=128): padded lanes must be
    #    exactly zero; real lanes must match.  (The slice here is test-only;
    #    production keeps the padded layout downstream.)
    h2 = 64
    w2 = jax.random.normal(ks[7], (Cin, h2), jnp.float32) * 0.1
    b2 = 0.1 * jnp.arange(h2, dtype=jnp.float32) / h2
    g2 = jnp.ones((h2,), jnp.float32)
    be2 = jnp.zeros((h2,), jnp.float32)
    ref2 = input_proj_ref_tokens(x_tokens.astype(jnp.bfloat16),
                                 w2.astype(jnp.bfloat16), b2, g2, be2,
                                 num_groups=num_groups)
    got2 = input_proj_pallas(x_tokens, w2, b2, g2, be2, num_groups=num_groups,
                             hw_tile_cap=64, channel_splits=1)
    got2 = jax.block_until_ready(got2)
    assert got2.shape == (B, HW, 128)
    assert bool(jnp.all(got2[:, :, h2:] == 0)), "padded channels must be zero"
    assert max_rel(got2[:, :, :h2], ref2) < 1e-2, "padded-path mismatch"

    # 3) Kernel vs full-f32 PyTorch-layout (NCHW) reference, loose tolerance
    #    for bf16 matmul inputs / bf16 output (layout change is test-only).
    ref_f32 = input_proj_ref_nchw(image, params["conv_w"], params["conv_b"],
                                  params["gn_gamma"], params["gn_beta"],
                                  num_groups=num_groups)
    got_nchw = jnp.transpose(
        got_1.astype(jnp.float32).reshape(B, H, W, hidden), (0, 3, 1, 2))
    assert max_rel(got_nchw, ref_f32) < 5e-2, "NCHW reference mismatch"

    # Full forward (inference path) producing the Pix2Seq output dict.
    out = pix2seq_forward(image, params, num_groups=num_groups)
    out = jax.block_until_ready(out)
    assert out["pred_seq_logits"].shape == (B, num_seq, num_vocal)
    assert out["pred_seq"].shape == (B, num_seq)

    print("KERNEL_OK")
</pallas_src>

<mosaic_0001>
module attributes {stable_mosaic.version = 11 : i64} {
  func.func @_input_proj_kernel(%arg0: i32, %arg1: i32, %arg2: i32, %arg3: memref<1x256x128xbf16, #tpu.memory_space<vmem>>, %arg4: memref<128x256xbf16, #tpu.memory_space<vmem>>, %arg5: memref<3x256xf32, #tpu.memory_space<vmem>>, %arg6: memref<256x256xbf16, #tpu.memory_space<vmem>>, %arg7: memref<1x256x256xbf16, #tpu.memory_space<vmem>>, %arg8: memref<1x256xf32, #tpu.memory_space<vmem>>, %arg9: memref<256x256xf32, #tpu.memory_space<vmem>>) attributes {dimension_semantics = [#tpu.dimension_semantics<parallel>, #tpu.dimension_semantics<parallel>, #tpu.dimension_semantics<arbitrary>], iteration_bounds = array<i64: 2, 1, 1>, scalar_prefetch = 0 : i64, scratch_operands = 2 : i64, tpu.core_type = #tpu.core_type<tc>, window_params = [{transform_indices = @transform_0, window_bounds = array<i64: 1, 256, 128>}, {transform_indices = @transform_1, window_bounds = array<i64: 128, 256>}, {transform_indices = @transform_2, window_bounds = array<i64: 3, 256>}, {transform_indices = @transform_3, window_bounds = array<i64: 256, 256>}, {transform_indices = @transform_4, window_bounds = array<i64: 1, 256, 256>}]} {
    %c0_i32 = arith.constant 0 : i32
    %0 = arith.cmpi eq, %arg2, %c0_i32 : i32
    %1 = arith.extui %0 : i1 to i32
    %c0_i32_0 = arith.constant 0 : i32
    %2 = arith.cmpi ne, %1, %c0_i32_0 : i32
    scf.if %2 {
      %cst_13 = arith.constant 0.000000e+00 : f32
      %19 = vector.broadcast %cst_13 : f32 to vector<1x256xf32>
      %c0_14 = arith.constant 0 : index
      %c0_15 = arith.constant 0 : index
      %20 = vector.load %arg8[%c0_14, %c0_15] : memref<1x256xf32, #tpu.memory_space<vmem>>, vector<1x256xf32>
      tpu.vector_store %arg8[%c0_14, %c0_15], %19 {strides = array<i32>} : memref<1x256xf32, #tpu.memory_space<vmem>>, vector<1x256xf32>,
    } else {
    }
    %c0 = arith.constant 0 : index
    %c0_1 = arith.constant 0 : index
    %c0_2 = arith.constant 0 : index
    %3 = vector.load %arg3[%c0, %c0_1, %c0_2] : memref<1x256x128xbf16, #tpu.memory_space<vmem>>, vector<1x256x128xbf16>
    %4 = vector.shape_cast %3 : vector<1x256x128xbf16> to vector<256x128xbf16>
    %c0_3 = arith.constant 0 : index
    %c0_4 = arith.constant 0 : index
    %5 = vector.load %arg4[%c0_3, %c0_4] : memref<128x256xbf16, #tpu.memory_space<vmem>>, vector<128x256xbf16>
    %cst = arith.constant dense<0.000000e+00> : vector<256x256xf32>
    %6 = tpu.matmul %4, %5, %cst {dimension_numbers = #tpu.dot_dimension_numbers<[1], [0], [0], [1], [0, 0, 1, 1], [], []>} : vector<256x128xbf16>, vector<128x256xbf16>, vector<256x256xf32> -> vector<256x256xf32>
    %c256_i32 = arith.constant 256 : i32
    %7 = arith.muli %arg2, %c256_i32 : i32
    %8 = tpu.assume_multiple %7, 256 : i32
    %9 = arith.index_cast %8 : i32 to index
    %c0_5 = arith.constant 0 : index
    %10 = vector.load %arg9[%9, %c0_5] : memref<256x256xf32, #tpu.memory_space<vmem>>, vector<256x256xf32>
    tpu.vector_store %arg9[%9, %c0_5], %6 {strides = array<i32>} : memref<256x256xf32, #tpu.memory_space<vmem>>, vector<256x256xf32>,
    %c0_6 = arith.constant 0 : index
    %c0_7 = arith.constant 0 : index
    %11 = vector.load %arg8[%c0_6, %c0_7] : memref<1x256xf32, #tpu.memory_space<vmem>>, vector<1x256xf32>
    %cst_8 = arith.constant dense<0.000000e+00> : vector<256xf32>
    %12 = vector.multi_reduction <add>, %6, %cst_8 [0] : vector<256x256xf32> to vector<256xf32>
    %13 = vector.shape_cast %12 : vector<256xf32> to vector<1x256xf32>
    %14 = arith.addf %11, %13 : vector<1x256xf32>
    %c0_9 = arith.constant 0 : index
    %c0_10 = arith.constant 0 : index
    %15 = vector.load %arg8[%c0_9, %c0_10] : memref<1x256xf32, #tpu.memory_space<vmem>>, vector<1x256xf32>
    tpu.vector_store %arg8[%c0_9, %c0_10], %14 {strides = array<i32>} : memref<1x256xf32, #tpu.memory_space<vmem>>, vector<1x256xf32>,
    %c0_i32_11 = arith.constant 0 : i32
    %16 = arith.cmpi eq, %arg2, %c0_i32_11 : i32
    %17 = arith.extui %16 : i1 to i32
    %c0_i32_12 = arith.constant 0 : i32
    %18 = arith.cmpi ne, %17, %c0_i32_12 : i32
    scf.if %18 {
      %c0_13 = arith.constant 0 : index
      %c0_14 = arith.constant 0 : index
      %19 = vector.load %arg5[%c0_13, %c0_14] : memref<3x256xf32, #tpu.memory_space<vmem>>, vector<1x256xf32>
      %c1 = arith.constant 1 : index
      %c0_15 = arith.constant 0 : index
      %20 = vector.load %arg5[%c1, %c0_15] : memref<3x256xf32, #tpu.memory_space<vmem>>, vector<1x256xf32>
      %c2 = arith.constant 2 : index
      %c0_16 = arith.constant 0 : index
      %21 = vector.load %arg5[%c2, %c0_16] : memref<3x256xf32, #tpu.memory_space<vmem>>, vector<1x256xf32>
      %c0_17 = arith.constant 0 : index
      %c0_18 = arith.constant 0 : index
      %22 = vector.load %arg8[%c0_17, %c0_18] : memref<1x256xf32, #tpu.memory_space<vmem>>, vector<1x256xf32>
      %cst_19 = arith.constant 3.906250e-03 : f32
      %23 = vector.broadcast %cst_19 : f32 to vector<1x256xf32>
      %24 = arith.mulf %22, %23 : vector<1x256xf32>
      %25 = arith.addf %24, %19 : vector<1x256xf32>
      %26 = arith.truncf %25 : vector<1x256xf32> to vector<1x256xbf16>
      %c0_20 = arith.constant 0 : index
      %c0_21 = arith.constant 0 : index
      %27 = vector.load %arg6[%c0_20, %c0_21] : memref<256x256xbf16, #tpu.memory_space<vmem>>, vector<256x256xbf16>
      %cst_22 = arith.constant dense<0.000000e+00> : vector<1x256xf32>
      %28 = tpu.matmul %26, %27, %cst_22 {dimension_numbers = #tpu.dot_dimension_numbers<[1], [0], [0], [1], [0, 0, 1, 1], [], []>} : vector<1x256xbf16>, vector<256x256xbf16>, vector<1x256xf32> -> vector<1x256xf32>
      %29 = arith.subf %28, %19 : vector<1x256xf32>
      %cst_23 = arith.constant 0.000000e+00 : f32
      %30 = vector.broadcast %cst_23 : f32 to vector<1x256xf32>
      %c0_i32_24 = arith.constant 0 : i32
      %c256_i32_25 = arith.constant 256 : i32
      %31 = arith.muli %c0_i32_24, %c256_i32_25 : i32
      %32 = tpu.assume_multiple %31, 256 : i32
      %33 = arith.index_cast %32 : i32 to index
      %c0_26 = arith.constant 0 : index
      %34 = vector.load %arg9[%33, %c0_26] : memref<256x256xf32, #tpu.memory_space<vmem>>, vector<256x256xf32>
      %35 = vector.broadcast %29 : vector<1x256xf32> to vector<256x256xf32>
      %36 = arith.subf %34, %35 : vector<256x256xf32>
      %37 = arith.mulf %36, %36 : vector<256x256xf32>
      %cst_27 = arith.constant dense<0.000000e+00> : vector<256xf32>
      %38 = vector.multi_reduction <add>, %37, %cst_27 [0] : vector<256x256xf32> to vector<256xf32>
      %39 = vector.shape_cast %38 : vector<256xf32> to vector<1x256xf32>
      %40 = arith.addf %30, %39 : vector<1x256xf32>
      %c1_i32 = arith.constant 1 : i32
      %cst_28 = arith.constant 3.906250e-03 : f32
      %41 = vector.broadcast %cst_28 : f32 to vector<1x256xf32>
      %42 = arith.mulf %40, %41 : vector<1x256xf32>
      %43 = arith.truncf %42 : vector<1x256xf32> to vector<1x256xbf16>
      %c0_29 = arith.constant 0 : index
      %c0_30 = arith.constant 0 : index
      %44 = vector.load %arg6[%c0_29, %c0_30] : memref<256x256xbf16, #tpu.memory_space<vmem>>, vector<256x256xbf16>
      %cst_31 = arith.constant dense<0.000000e+00> : vector<1x256xf32>
      %45 = tpu.matmul %43, %44, %cst_31 {dimension_numbers = #tpu.dot_dimension_numbers<[1], [0], [0], [1], [0, 0, 1, 1], [], []>} : vector<1x256xbf16>, vector<256x256xbf16>, vector<1x256xf32> -> vector<1x256xf32>
      %cst_32 = arith.constant 0.000000e+00 : f32
      %46 = vector.broadcast %cst_32 : f32 to vector<1x256xf32>
      %47 = arith.maximumf %45, %46 : vector<1x256xf32>
      %cst_33 = arith.constant 9.99999974E-6 : f32
      %48 = vector.broadcast %cst_33 : f32 to vector<1x256xf32>
      %49 = arith.addf %47, %48 : vector<1x256xf32>
      %50 = math.rsqrt %49 : vector<1x256xf32>
      %51 = arith.mulf %50, %20 : vector<1x256xf32>
      %52 = arith.mulf %29, %51 : vector<1x256xf32>
      %53 = arith.subf %21, %52 : vector<1x256xf32>
      %c0_i32_34 = arith.constant 0 : i32
      %c256_i32_35 = arith.constant 256 : i32
      %54 = arith.muli %c0_i32_34, %c256_i32_35 : i32
      %55 = tpu.assume_multiple %54, 256 : i32
      %56 = arith.index_cast %55 : i32 to index
      %c0_36 = arith.constant 0 : index
      %57 = vector.load %arg9[%56, %c0_36] : memref<256x256xf32, #tpu.memory_space<vmem>>, vector<256x256xf32>
      %58 = vector.broadcast %51 : vector<1x256xf32> to vector<256x256xf32>
      %59 = arith.mulf %57, %58 : vector<256x256xf32>
      %60 = vector.broadcast %53 : vector<1x256xf32> to vector<256x256xf32>
      %61 = arith.addf %59, %60 : vector<256x256xf32>
      %62 = arith.truncf %61 : vector<256x256xf32> to vector<256x256xbf16>
      %c0_37 = arith.constant 0 : index
      %63 = arith.index_cast %55 : i32 to index
      %c0_38 = arith.constant 0 : index
      %64 = vector.load %arg7[%c0_37, %63, %c0_38] : memref<1x256x256xbf16, #tpu.memory_space<vmem>>, vector<1x256x256xbf16>
      %65 = vector.shape_cast %64 : vector<1x256x256xbf16> to vector<256x256xbf16>
      %66 = vector.shape_cast %62 : vector<256x256xbf16> to vector<1x256x256xbf16>
      tpu.vector_store %arg7[%c0_37, %63, %c0_38], %66 {strides = array<i32>} : memref<1x256x256xbf16, #tpu.memory_space<vmem>>, vector<1x256x256xbf16>,
      %c1_i32_39 = arith.constant 1 : i32
    } else {
    }
    return
  }
  func.func @transform_0(%arg0: i32, %arg1: i32, %arg2: i32) -> (i32, i32, i32) {
    %c0_i32 = arith.constant 0 : i32
    %c0_i32_0 = arith.constant 0 : i32
    return %arg0, %arg2, %c0_i32 : i32, i32, i32
  }
  func.func @transform_1(%arg0: i32, %arg1: i32, %arg2: i32) -> (i32, i32) {
    %c0_i32 = arith.constant 0 : i32
    %c0_i32_0 = arith.constant 0 : i32
    return %c0_i32, %arg1 : i32, i32
  }
  func.func @transform_2(%arg0: i32, %arg1: i32, %arg2: i32) -> (i32, i32) {
    %c0_i32 = arith.constant 0 : i32
    %c0_i32_0 = arith.constant 0 : i32
    return %c0_i32, %arg1 : i32, i32
  }
  func.func @transform_3(%arg0: i32, %arg1: i32, %arg2: i32) -> (i32, i32) {
    %c0_i32 = arith.constant 0 : i32
    return %arg1, %arg1 : i32, i32
  }
  func.func @transform_4(%arg0: i32, %arg1: i32, %arg2: i32) -> (i32, i32, i32) {
    %c0_i32 = arith.constant 0 : i32
    %c0_i32_0 = arith.constant 0 : i32
    return %arg0, %c0_i32, %arg1 : i32, i32, i32
  }
}

</mosaic_0001>

<llo_original>
// kernel: tpu_custom_call.1
$region0: #{tpu_custom_call.1}
  #allocation0 [shape = 'u32[]', space=smem, size = 0x4, offset = 0x4, fixed_abs, tag = 'smem constant byte address 0x4 - core index']
  #allocation1 [shape = 'u32[144,128]{1,0:T(1,128)}', space=vmem, size = 0x12000, scoped, tag = 'internal scratch']
  #allocation2 [shape = 'f32[1,256]{1,0:T(1,128)}', space=vmem, size = 0x400, scoped, tag = 'scratch operand']
  #allocation3 [shape = 'f32[256,256]{1,0:T(8,128)}', space=vmem, size = 0x40000, scoped, tag = 'scratch operand']
  %s0 = inlined_call_operand.hbm [shape: bf16[2,256,128], index: 0, kind: input, shape index: {}]
  %s1 = inlined_call_operand.hbm [shape: bf16[128,256], index: 1, kind: input, shape index: {}]
  %s2 = inlined_call_operand.hbm [shape: f32[3,256], index: 2, kind: input, shape index: {}]
  %s3 = inlined_call_operand.hbm [shape: bf16[256,256], index: 3, kind: input, shape index: {}]
  %s4 = inlined_call_operand.hbm [shape: bf16[2,256,256], index: 4, kind: output, shape index: {}]
  %s5 = sld [smem:[#allocation0]]
  $region73: #{tpu_custom_call.1} parent=0
    _
  %s7 = ssub.s32 1, %s5
  %s8 = scalar_select 0, %s7, %s5
  $region1: #{tpu_custom_call.1} parent=0
    #allocation4 [shape = 'u8[131072]{0}', space=vmem, size = 0x20000, scoped, tag = 'input window, operand 0']
    #allocation5 [shape = 's32[2]{0}', space=sflag, size = 0x8, scoped, tag = 'scoped memory for tpu_custom_call.1']
    #allocation6 [shape = 's32[2]{0}', space=sflag, size = 0x8, scoped, tag = 'scoped memory for tpu_custom_call.1']
    #allocation7 [shape = 'u8[65536]{0}', space=vmem, size = 0x10000, scoped, tag = 'input window, operand 1, single buffered']
    #allocation8 [shape = 's32[1]{0}', space=sflag, size = 0x4, scoped, tag = 'scoped memory for tpu_custom_call.1']
    #allocation9 [shape = 'u8[4096]{0}', space=vmem, size = 0x1000, scoped, tag = 'input window, operand 2, single buffered']
    #allocation10 [shape = 'u8[131072]{0}', space=vmem, size = 0x20000, scoped, tag = 'input window, operand 3, single buffered']
    #allocation11 [shape = 's32[1]{0}', space=sflag, size = 0x4, scoped, tag = 'scoped memory for tpu_custom_call.1']
    #allocation12 [shape = 'u8[262144]{0}', space=vmem, size = 0x40000, scoped, tag = 'output window, operand 0']
    %9 = vsyncpa [#allocation5], 0
    %s10 = scalar_lea.sflag [#allocation5], 1
    %11 = vsyncpa %s10, 0
    %12 = vsyncpa [#allocation8], 0
    %13 = vsyncpa [#allocation11], 0
    %14 = vsyncpa [#allocation6], 0
    %s15 = scalar_lea.sflag [#allocation6], 1
    %16 = vsyncpa %s15, 0
    loop: start=0, step=1, limit=4
    $region2: #{tpu_custom_call.1} parent=1 // loop_pre_header
      _
    $region3: #{tpu_custom_call.1} parent=1 // loop_header
      %s18 = sphi 0, %s22
      %p19 = scmp.ge.s32.totalorder %s18, 4
      %s25 = sphi 0, %s44
      %s26 = sphi 0, %s40
      %s27 = sphi 0, %s36
      %s28 = sphi 0, %s25
      %s29 = sphi 0, %s26
      %s30 = sphi 0, %s27
      %s31 = sphi 0, %s28
      %s32 = sphi 0, %s29
      %s33 = sphi 0, %s30
      %s49 = sphi 0, %s51
      %s52 = sphi 0, %s49
      %s53 = sphi 0, %s52
      %s69 = sphi 0, %s53
      %s75 = sphi 0, %s77
      %s78 = sphi 0, %s75
      %s79 = sphi 0, %s78
      %s95 = sphi 0, %s79
      %s101 = sphi 0, %s103
      %s104 = sphi 0, %s101
      %s105 = sphi 0, %s104
      %s121 = sphi 0, %s105
      %s129 = sphi 0, %s131
      %s132 = sphi 0, %s129
      %s133 = sphi 0, %s132
      %s149 = sphi 0, %s133
      %s157 = sphi 0, %s159
      %s160 = sphi 0, %s157
      %s161 = sphi 0, %s160
      %s177 = sphi 0, %s161
    $region4: #{tpu_custom_call.1} parent=1 // loop_header_branch
      %21 = sbr.rel (%p19) target = $region8
    $region5: #{tpu_custom_call.1} parent=1 // loop_body
      %s23 = ssub.s32 %s18, 1
      %s24 = ssub.s32 %s18, 2
      %s34 = sadd.s32 1, %s27
      %p35 = scmp.ge.s32.totalorder %s34, 1
      %s36 = scalar_select %p35, 0, %s34
      %s37 = sadd.s32 1, %s26
      %s38 = scalar_select %p35, %s37, %s26
      %p39 = scmp.ge.s32.totalorder %s38, 1
      %s40 = scalar_select %p39, 0, %s38
      %s41 = sadd.s32 1, %s25
      %s42 = scalar_select %p39, %s41, %s25
      %p43 = scmp.ge.s32.totalorder %s42, 2
      %s44 = scalar_select %p43, 0, %s42
      %s45 = ssub.s32 %s25, %s44
      %s46 = ssub.s32 %s27, %s36
      %s47 = sor.u32 %s45, %s46
      %p48 = scmp.eq.s32.totalorder %s47, 0
      %s50 = sadd.s32 %s49, 1
      %s51 = scalar_select %p48, %s49, %s50
      %p54 = pneg %p48
      %p55 = scmp.eq.s32.totalorder %s18, 1
      %p56 = por %p54, %p55
      %p57 = scmp.ne.s32.totalorder %s49, %s52
      %p58 = scmp.eq.s32.totalorder %s18, 0
      %p59 = por %p57, %p58
      %p60 = scmp.ne.s32.totalorder %s49, %s52
      %p61 = scmp.eq.s32.totalorder %s23, 1
      %p62 = por %p60, %p61
      %p63 = scmp.ne.s32.totalorder %s52, %s53
      %p64 = scmp.eq.s32.totalorder %s23, 0
      %p65 = por %p63, %p64
      %p66 = scmp.ne.s32.totalorder %s52, %s53
      %p67 = scmp.eq.s32.totalorder %s24, 1
      %p68 = por %p66, %p67
      %p70 = scmp.ne.s32.totalorder %s53, %s69
      %p71 = scmp.eq.s32.totalorder %s24, 0
      %p72 = por %p70, %p71
      %s73 = ssub.s32 %s26, %s40
      %p74 = scmp.eq.s32.totalorder %s73, 0
      %s76 = sadd.s32 %s75, 1
      %s77 = scalar_select %p74, %s75, %s76
      %p80 = pneg %p74
      %p81 = scmp.eq.s32.totalorder %s18, 1
      %p82 = por %p80, %p81
      %p83 = scmp.ne.s32.totalorder %s75, %s78
      %p84 = scmp.eq.s32.totalorder %s18, 0
      %p85 = por %p83, %p84
      %p86 = scmp.ne.s32.totalorder %s75, %s78
      %p87 = scmp.eq.s32.totalorder %s23, 1
      %p88 = por %p86, %p87
      %p89 = scmp.ne.s32.totalorder %s78, %s79
      %p90 = scmp.eq.s32.totalorder %s23, 0
      %p91 = por %p89, %p90
      %p92 = scmp.ne.s32.totalorder %s78, %s79
      %p93 = scmp.eq.s32.totalorder %s24, 1
      %p94 = por %p92, %p93
      %p96 = scmp.ne.s32.totalorder %s79, %s95
      %p97 = scmp.eq.s32.totalorder %s24, 0
      %p98 = por %p96, %p97
      %s99 = ssub.s32 %s26, %s40
      %p100 = scmp.eq.s32.totalorder %s99, 0
      %s102 = sadd.s32 %s101, 1
      %s103 = scalar_select %p100, %s101, %s102
      %p106 = pneg %p100
      %p107 = scmp.eq.s32.totalorder %s18, 1
      %p108 = por %p106, %p107
      %p109 = scmp.ne.s32.totalorder %s101, %s104
      %p110 = scmp.eq.s32.totalorder %s18, 0
      %p111 = por %p109, %p110
      %p112 = scmp.ne.s32.totalorder %s101, %s104
      %p113 = scmp.eq.s32.totalorder %s23, 1
      %p114 = por %p112, %p113
      %p115 = scmp.ne.s32.totalorder %s104, %s105
      %p116 = scmp.eq.s32.totalorder %s23, 0
      %p117 = por %p115, %p116
      %p118 = scmp.ne.s32.totalorder %s104, %s105
      %p119 = scmp.eq.s32.totalorder %s24, 1
      %p120 = por %p118, %p119
      %p122 = scmp.ne.s32.totalorder %s105, %s121
      %p123 = scmp.eq.s32.totalorder %s24, 0
      %p124 = por %p122, %p123
      %s125 = ssub.s32 %s26, %s40
      %s126 = ssub.s32 %s26, %s40
      %s127 = sor.u32 %s125, %s126
      %p128 = scmp.eq.s32.totalorder %s127, 0
      %s130 = sadd.s32 %s129, 1
      %s131 = scalar_select %p128, %s129, %s130
      %p134 = pneg %p128
      %p135 = scmp.eq.s32.totalorder %s18, 1
      %p136 = por %p134, %p135
      %p137 = scmp.ne.s32.totalorder %s129, %s132
      %p138 = scmp.eq.s32.totalorder %s18, 0
      %p139 = por %p137, %p138
      %p140 = scmp.ne.s32.totalorder %s129, %s132
      %p141 = scmp.eq.s32.totalorder %s23, 1
      %p142 = por %p140, %p141
      %p143 = scmp.ne.s32.totalorder %s132, %s133
      %p144 = scmp.eq.s32.totalorder %s23, 0
      %p145 = por %p143, %p144
      %p146 = scmp.ne.s32.totalorder %s132, %s133
      %p147 = scmp.eq.s32.totalorder %s24, 1
      %p148 = por %p146, %p147
      %p150 = scmp.ne.s32.totalorder %s133, %s149
      %p151 = scmp.eq.s32.totalorder %s24, 0
      %p152 = por %p150, %p151
      %s153 = ssub.s32 %s25, %s44
      %s154 = ssub.s32 %s26, %s40
      %s155 = sor.u32 %s153, %s154
      %p156 = scmp.eq.s32.totalorder %s155, 0
      %s158 = sadd.s32 %s157, 1
      %s159 = scalar_select %p156, %s157, %s158
      %p162 = pneg %p156
      %p163 = scmp.eq.s32.totalorder %s18, 1
      %p164 = por %p162, %p163
      %p165 = scmp.ne.s32.totalorder %s157, %s160
      %p166 = scmp.eq.s32.totalorder %s18, 0
      %p167 = por %p165, %p166
      %p168 = scmp.ne.s32.totalorder %s157, %s160
      %p169 = scmp.eq.s32.totalorder %s23, 1
      %p170 = por %p168, %p169
      %p171 = scmp.ne.s32.totalorder %s160, %s161
      %p172 = scmp.eq.s32.totalorder %s23, 0
      %p173 = por %p171, %p172
      %p174 = scmp.ne.s32.totalorder %s160, %s161
      %p175 = scmp.eq.s32.totalorder %s24, 1
      %p176 = por %p174, %p175
      %p178 = scmp.ne.s32.totalorder %s161, %s177
      %p179 = scmp.eq.s32.totalorder %s24, 0
      %p180 = por %p178, %p179
      %p181 = scmp.le.s32.totalorder 1, %s18
      %p182 = scmp.lt.s32.totalorder %s18, 3
      %p183 = pnand %p181, %p182
      %p184 = pneg %p183
      // Predicated region
      $region9: #{tpu_custom_call.1} parent=5 // pred_check
        _
      $region10: #{tpu_custom_call.1} parent=5 // pred_check_branch
        %186 = sbr.rel (%p183) target = $region12
      $region11: #{tpu_custom_call.1} parent=5 // pred_region
        %s187 = ssub.s32 %s18, 1
        // Predicated region
        $region13: #{tpu_custom_call.1} parent=11 // pred_check
          %p188 = pneg %p91
        $region14: #{tpu_custom_call.1} parent=11 // pred_check_branch
          %190 = sbr.rel (%p188) target = $region16
        $region15: #{tpu_custom_call.1} parent=11 // pred_region
          %s191 = smul.u32 2, %s29
          %s193 = ssub.s32 2048, 2048
          %194 = vsyncadd [#allocation8], %s193
          %s195 = smul.addr %s191, 64
          %s196 = scalar_lea.hbm %s1, %s195
          %s197 = sshll.u32 [#allocation7], 4
          %s198 = int_to_ptr.vmem [resolvable:$true] %s197
          %203 = dma.hbm_to_vmem [thread:$0]  %s196, 2048, %s198, [#allocation8], 128, 128, 8
        $region16: #{tpu_custom_call.1} parent=11 // pred_fallthru
          _
        // Predicated region
        $region17: #{tpu_custom_call.1} parent=11 // pred_check
          %p204 = pneg %p117
        $region18: #{tpu_custom_call.1} parent=11 // pred_check_branch
          %206 = sbr.rel (%p204) target = $region20
        $region19: #{tpu_custom_call.1} parent=11 // pred_region
          %s207 = smul.u32 2, %s29
          %s209 = ssub.s32 128, 128
          %210 = vsyncadd [#allocation8], %s209
          %s211 = smul.addr %s207, 64
          %s212 = scalar_lea.hbm %s2, %s211
          %s214 = sshll.u32 [#allocation9], 4
          %s215 = int_to_ptr.vmem [resolvable:$true] %s214
          %217 = dma.hbm_to_vmem [thread:$0]  %s212, 128, %s215, [#allocation8]
        $region20: #{tpu_custom_call.1} parent=11 // pred_fallthru
          _
        // Predicated region
        $region21: #{tpu_custom_call.1} parent=11 // pred_check
          %p218 = pneg %p145
        $region22: #{tpu_custom_call.1} parent=11 // pred_check_branch
          %220 = sbr.rel (%p218) target = $region24
        $region23: #{tpu_custom_call.1} parent=11 // pred_region
          %s221 = smul.u32 32, %s29
          %s222 = smul.u32 2, %s29
          %s224 = ssub.s32 4096, 4096
          %225 = vsyncadd [#allocation11], %s224
          %s226 = smul.addr %s221, 2
          %s227 = sadd.s32 %s222, %s226
          %s228 = smul.addr %s227, 64
          %s229 = scalar_lea.hbm %s3, %s228
          %s230 = sshll.u32 [#allocation10], 4
          %s231 = int_to_ptr.vmem [resolvable:$true] %s230
          %236 = dma.hbm_to_vmem [thread:$0]  %s229, 4096, %s231, [#allocation11], 128, 128, 8
        $region24: #{tpu_custom_call.1} parent=11 // pred_fallthru
          _
      $region12: #{tpu_custom_call.1} parent=5 // pred_fallthru
        _
      %p237 = scmp.lt.s32.totalorder %s18, 2
      // Predicated region
      $region25: #{tpu_custom_call.1} parent=5 // pred_check
        %p238 = pneg %p237
      $region26: #{tpu_custom_call.1} parent=5 // pred_check_branch
        %240 = sbr.rel (%p238) target = $region28
      $region27: #{tpu_custom_call.1} parent=5 // pred_region
        // Predicated region
        $region29: #{tpu_custom_call.1} parent=27 // pred_check
          %p241 = pneg %p59
        $region30: #{tpu_custom_call.1} parent=27 // pred_check_branch
          %243 = sbr.rel (%p241) target = $region32
        $region31: #{tpu_custom_call.1} parent=27 // pred_region
          %s244 = sand.u32 %s49, 1
          %s245 = scalar_lea.sflag [#allocation5], %s244
          %s246 = sand.u32 %s49, 1
          %s247 = smul.addr %s246, 128
          %s248 = scalar_lea.vmem [#allocation4], %s247
          %s249 = smul.u32 32, %s27
          %s251 = ssub.s32 2048, 2048
          %252 = vsyncadd %s245, %s251
          %s253 = smul.addr %s25, 32
          %s254 = sadd.s32 %s249, %s253
          %s255 = smul.addr %s254, 64
          %s256 = scalar_lea.hbm %s0, %s255
          %s257 = sshll.u32 %s248, 4
          %s258 = int_to_ptr.vmem [resolvable:$true] %s257
          %263 = dma.hbm_to_vmem [thread:$0]  %s256, 2048, %s258, %s245, 64, 64, 4
        $region32: #{tpu_custom_call.1} parent=27 // pred_fallthru
          _
      $region28: #{tpu_custom_call.1} parent=5 // pred_fallthru
        _
      %p264 = scmp.le.s32.totalorder 1, %s18
      %p265 = scmp.lt.s32.totalorder %s18, 3
      %p266 = pnand %p264, %p265
      %p267 = pneg %p266
      // Predicated region
      $region33: #{tpu_custom_call.1} parent=5 // pred_check
        _
      $region34: #{tpu_custom_call.1} parent=5 // pred_check_branch
        %269 = sbr.rel (%p266) target = $region36
      $region35: #{tpu_custom_call.1} parent=5 // pred_region
        %s270 = ssub.s32 %s18, 1
        %s271 = sand.u32 %s52, 1
        %s272 = scalar_lea.sflag [#allocation5], %s271
        %s273 = sand.u32 %s52, 1
        %s274 = smul.addr %s273, 128
        %s275 = scalar_lea.vmem [#allocation4], %s274
        // Predicated region
        $region37: #{tpu_custom_call.1} parent=35 // pred_check
          %p276 = pneg %p65
        $region38: #{tpu_custom_call.1} parent=35 // pred_check_branch
          %278 = sbr.rel (%p276) target = $region40
        $region39: #{tpu_custom_call.1} parent=35 // pred_region
          %279 = dma.done %s272, 2048
        $region40: #{tpu_custom_call.1} parent=35 // pred_fallthru
          _
        // Predicated region
        $region41: #{tpu_custom_call.1} parent=35 // pred_check
          %p280 = pneg %p91
        $region42: #{tpu_custom_call.1} parent=35 // pred_check_branch
          %282 = sbr.rel (%p280) target = $region44
        $region43: #{tpu_custom_call.1} parent=35 // pred_region
          %283 = dma.done [#allocation8], 2048
        $region44: #{tpu_custom_call.1} parent=35 // pred_fallthru
          _
        // Predicated region
        $region45: #{tpu_custom_call.1} parent=35 // pred_check
          %p284 = pneg %p117
        $region46: #{tpu_custom_call.1} parent=35 // pred_check_branch
          %286 = sbr.rel (%p284) target = $region48
        $region47: #{tpu_custom_call.1} parent=35 // pred_region
          %287 = dma.done [#allocation8], 128
        $region48: #{tpu_custom_call.1} parent=35 // pred_fallthru
          _
        // Predicated region
        $region49: #{tpu_custom_call.1} parent=35 // pred_check
          %p288 = pneg %p145
        $region50: #{tpu_custom_call.1} parent=35 // pred_check_branch
          %290 = sbr.rel (%p288) target = $region52
        $region51: #{tpu_custom_call.1} parent=35 // pred_region
          %291 = dma.done [#allocation11], 4096
        $region52: #{tpu_custom_call.1} parent=35 // pred_fallthru
          _
        %s292 = sand.u32 %s52, 1
        %s293 = scalar_lea.sflag [#allocation5], %s292
        %s294 = sand.u32 %s52, 1
        %s295 = smul.addr %s294, 128
        %s296 = scalar_lea.vmem [#allocation4], %s295
        %p297 = pneg %p65
        %p298 = pneg %p62
        %p299 = pneg %p91
        %p300 = pneg %p88
        %p301 = pneg %p117
        %p302 = pneg %p114
        %p303 = pneg %p145
        %p304 = pneg %p142
        %p305 = pneg %p173
        %p306 = pneg %p170
        %s307 = sand.u32 %s160, 1
        %s308 = scalar_lea.sflag [#allocation6], %s307
        %s309 = sand.u32 %s160, 1
        %s310 = smul.addr %s309, 256
        %s311 = scalar_lea.vmem [#allocation12], %s310
        %s312 = smul.u32 32, %s30
        %s313 = smul.u32 2, %s29
        %s314 = smul.u32 2, %s29
        %s315 = smul.u32 32, %s29
        %s316 = smul.u32 2, %s29
        %s317 = smul.u32 2, %s29
        %p319 = scmp.eq.s32.totalorder %s30, 0
        // Predicated region
        $region53: #{tpu_custom_call.1} parent=35 // pred_check
          %p320 = pneg %p319
        $region54: #{tpu_custom_call.1} parent=35 // pred_check_branch
          %322 = sbr.rel (%p320) target = $region56
        $region55: #{tpu_custom_call.1} parent=35 // pred_region
          %v323 = vlaneseq
          %vm324 = vcmp.ge.s32.totalorder %v323, 0
          %vm325 = vcmp.lt.s32.totalorder %v323, 256
          %vm326 = vmand %vm324, %vm325
          %327 = vst.msk [vmem:[#allocation2] sm:$0x3] %vm326, 0.0
        $region56: #{tpu_custom_call.1} parent=35 // pred_fallthru
          _
        %v328 = vld [vmem:[%s275] sm:$0xf]
        %v329 = vld [vmem:[%s275 + $0x4] sm:$0xf]
        %v330 = vld [vmem:[%s275 + $0x8] sm:$0xf]
        %v331 = vld [vmem:[%s275 + $0xc] sm:$0xf]
        %v332 = vld [vmem:[%s275 + $0x10] sm:$0xf]
        %v333 = vld [vmem:[%s275 + $0x14] sm:$0xf]
        %v334 = vld [vmem:[%s275 + $0x18] sm:$0xf]
        %v335 = vld [vmem:[%s275 + $0x1c] sm:$0xf]
        %v336 = vld [vmem:[%s275 + $0x20] sm:$0xf]
        %v337 = vld [vmem:[%s275 + $0x24] sm:$0xf]
        %v338 = vld [vmem:[%s275 + $0x28] sm:$0xf]
        %v339 = vld [vmem:[%s275 + $0x2c] sm:$0xf]
        %v340 = vld [vmem:[%s275 + $0x30] sm:$0xf]
        %v341 = vld [vmem:[%s275 + $0x34] sm:$0xf]
        %v342 = vld [vmem:[%s275 + $0x38] sm:$0xf]
        %v343 = vld [vmem:[%s275 + $0x3c] sm:$0xf]
        %v344 = vld [vmem:[%s275 + $0x40] sm:$0xf]
        %v345 = vld [vmem:[%s275 + $0x44] sm:$0xf]
        %v346 = vld [vmem:[%s275 + $0x48] sm:$0xf]
        %v347 = vld [vmem:[%s275 + $0x4c] sm:$0xf]
        %v348 = vld [vmem:[%s275 + $0x50] sm:$0xf]
        %v349 = vld [vmem:[%s275 + $0x54] sm:$0xf]
        %v350 = vld [vmem:[%s275 + $0x58] sm:$0xf]
        %v351 = vld [vmem:[%s275 + $0x5c] sm:$0xf]
        %v352 = vld [vmem:[%s275 + $0x60] sm:$0xf]
        %v353 = vld [vmem:[%s275 + $0x64] sm:$0xf]
        %v354 = vld [vmem:[%s275 + $0x68] sm:$0xf]
        %v355 = vld [vmem:[%s275 + $0x6c] sm:$0xf]
        %v356 = vld [vmem:[%s275 + $0x70] sm:$0xf]
        %v357 = vld [vmem:[%s275 + $0x74] sm:$0xf]
        %v358 = vld [vmem:[%s275 + $0x78] sm:$0xf]
        %v359 = vld [vmem:[%s275 + $0x7c] sm:$0xf]
        %v360 = vld [vmem:[#allocation7] sm:$0xff]
        %v361 = vld [vmem:[#allocation7 + $0x8] sm:$0xff]
        %v362 = vld [vmem:[#allocation7 + $0x10] sm:$0xff]
        %v363 = vld [vmem:[#allocation7 + $0x18] sm:$0xff]
        %v364 = vld [vmem:[#allocation7 + $0x20] sm:$0xff]
        %v365 = vld [vmem:[#allocation7 + $0x28] sm:$0xff]
        %v366 = vld [vmem:[#allocation7 + $0x30] sm:$0xff]
        %v367 = vld [vmem:[#allocation7 + $0x38] sm:$0xff]
        %v368 = vld [vmem:[#allocation7 + $0x40] sm:$0xff]
        %v369 = vld [vmem:[#allocation7 + $0x48] sm:$0xff]
        %v370 = vld [vmem:[#allocation7 + $0x50] sm:$0xff]
        %v371 = vld [vmem:[#allocation7 + $0x58] sm:$0xff]
        %v372 = vld [vmem:[#allocation7 + $0x60] sm:$0xff]
        %v373 = vld [vmem:[#allocation7 + $0x68] sm:$0xff]
        %v374 = vld [vmem:[#allocation7 + $0x70] sm:$0xff]
        %v375 = vld [vmem:[#allocation7 + $0x78] sm:$0xff]
        %v408 = vunpack.c.l.b16 %v328
        %v409 = vunpack.c.l.b16 %v329
        %v410 = vunpack.c.l.b16 %v330
        %v411 = vunpack.c.l.b16 %v331
        %v412 = vunpack.c.l.b16 %v332
        %v413 = vunpack.c.l.b16 %v333
        %v414 = vunpack.c.l.b16 %v334
        %v415 = vunpack.c.l.b16 %v335
        %v416 = vunpack.c.l.b16 %v336
        %v417 = vunpack.c.l.b16 %v337
        %v418 = vunpack.c.l.b16 %v338
        %v419 = vunpack.c.l.b16 %v339
        %v420 = vunpack.c.l.b16 %v340
        %v421 = vunpack.c.l.b16 %v341
        %v422 = vunpack.c.l.b16 %v342
        %v423 = vunpack.c.l.b16 %v343
        %v424 = vunpack.c.l.b16 %v344
        %v425 = vunpack.c.l.b16 %v345
        %v426 = vunpack.c.l.b16 %v346
        %v427 = vunpack.c.l.b16 %v347
        %v428 = vunpack.c.l.b16 %v348
        %v429 = vunpack.c.l.b16 %v349
        %v430 = vunpack.c.l.b16 %v350
        %v431 = vunpack.c.l.b16 %v351
        %v432 = vunpack.c.l.b16 %v352
        %v433 = vunpack.c.l.b16 %v353
        %v434 = vunpack.c.l.b16 %v354
        %v435 = vunpack.c.l.b16 %v355
        %v436 = vunpack.c.l.b16 %v356
        %v437 = vunpack.c.l.b16 %v357
        %v438 = vunpack.c.l.b16 %v358
        %v439 = vunpack.c.l.b16 %v359
        %v440 = vpack.c.b16 %v409, %v408
        %v441 = vpack.c.b16 %v411, %v410
        %v442 = vpack.c.b16 %v413, %v412
        %v443 = vpack.c.b16 %v415, %v414
        %v444 = vpack.c.b16 %v417, %v416
        %v445 = vpack.c.b16 %v419, %v418
        %v446 = vpack.c.b16 %v421, %v420
        %v447 = vpack.c.b16 %v423, %v422
        %v448 = vpack.c.b16 %v425, %v424
        %v449 = vpack.c.b16 %v427, %v426
        %v450 = vpack.c.b16 %v429, %v428
        %v451 = vpack.c.b16 %v431, %v430
        %v452 = vpack.c.b16 %v433, %v432
        %v453 = vpack.c.b16 %v435, %v434
        %v454 = vpack.c.b16 %v437, %v436
        %v455 = vpack.c.b16 %v439, %v438
        %v488 = vunpack.c.l.b16 %v360
        %v489 = vunpack.c.h.b16 %v360
        %v490 = vunpack.c.l.b16 %v361
        %v491 = vunpack.c.h.b16 %v361
        %v492 = vunpack.c.l.b16 %v362
        %v493 = vunpack.c.h.b16 %v362
        %v494 = vunpack.c.l.b16 %v363
        %v495 = vunpack.c.h.b16 %v363
        %v496 = vunpack.c.l.b16 %v364
        %v497 = vunpack.c.h.b16 %v364
        %v498 = vunpack.c.l.b16 %v365
        %v499 = vunpack.c.h.b16 %v365
        %v500 = vunpack.c.l.b16 %v366
        %v501 = vunpack.c.h.b16 %v366
        %v502 = vunpack.c.l.b16 %v367
        %v503 = vunpack.c.h.b16 %v367
        %v504 = vunpack.c.l.b16 %v368
        %v505 = vunpack.c.h.b16 %v368
        %v506 = vunpack.c.l.b16 %v369
        %v507 = vunpack.c.h.b16 %v369
        %v508 = vunpack.c.l.b16 %v370
        %v509 = vunpack.c.h.b16 %v370
        %v510 = vunpack.c.l.b16 %v371
        %v511 = vunpack.c.h.b16 %v371
        %v512 = vunpack.c.l.b16 %v372
        %v513 = vunpack.c.h.b16 %v372
        %v514 = vunpack.c.l.b16 %v373
        %v515 = vunpack.c.h.b16 %v373
        %v516 = vunpack.c.l.b16 %v374
        %v517 = vunpack.c.h.b16 %v374
        %v518 = vunpack.c.l.b16 %v375
        %v519 = vunpack.c.h.b16 %v375
        %v520 = vpack.c.b16 %v490, %v488
        %v521 = vpack.c.b16 %v491, %v489
        %v522 = vpack.c.b16 %v494, %v492
        %v523 = vpack.c.b16 %v495, %v493
        %v524 = vpack.c.b16 %v498, %v496
        %v525 = vpack.c.b16 %v499, %v497
        %v526 = vpack.c.b16 %v502, %v500
        %v527 = vpack.c.b16 %v503, %v501
        %v528 = vpack.c.b16 %v506, %v504
        %v529 = vpack.c.b16 %v507, %v505
        %v530 = vpack.c.b16 %v510, %v508
        %v531 = vpack.c.b16 %v511, %v509
        %v532 = vpack.c.b16 %v514, %v512
        %v533 = vpack.c.b16 %v515, %v513
        %v534 = vpack.c.b16 %v518, %v516
        %v535 = vpack.c.b16 %v519, %v517
        %552 = vmatprep.subr.bf16.mxu0 %v535
        %553 = vmatpush1.bf16.msra.mxu0 %v534
        %554 = vmatprep.subr.bf16.mxu0 %v533
        %555 = vmatpush1.bf16.msra.mxu0 %v532
        %556 = vmatprep.subr.bf16.mxu0 %v531
        %557 = vmatpush1.bf16.msra.mxu0 %v530
        %558 = vmatprep.subr.bf16.mxu0 %v529
        %559 = vmatpush1.bf16.msra.mxu0 %v528
        %560 = vmatprep.subr.bf16.mxu0 %v527
        %561 = vmatpush1.bf16.msra.mxu0 %v526
        %562 = vmatprep.subr.bf16.mxu0 %v525
        %563 = vmatpush1.bf16.msra.mxu0 %v524
        %564 = vmatprep.subr.bf16.mxu0 %v523
        %565 = vmatpush1.bf16.msra.mxu0 %v522
        %566 = vmatprep.subr.bf16.mxu0 %v521
        %567 = vmatpush1.bf16.msra.mxu0 %v520
        %568 = vmatprep.subr.bf16.mxu0 0
        %569 = vmatpush2.bf16.msra.mxu0 0
        %570 = vmatprep.subr.bf16.mxu0 0
        %571 = vmatpush2.bf16.msra.mxu0 0
        %572 = vmatprep.subr.bf16.mxu0 0
        %573 = vmatpush2.bf16.msra.mxu0 0
        %574 = vmatprep.subr.bf16.mxu0 0
        %575 = vmatpush2.bf16.msra.mxu0 0
        %576 = vmatprep.subr.bf16.mxu0 0
        %577 = vmatpush2.bf16.msra.mxu0 0
        %578 = vmatprep.subr.bf16.mxu0 0
        %579 = vmatpush2.bf16.msra.mxu0 0
        %580 = vmatprep.subr.bf16.mxu0 0
        %581 = vmatpush2.bf16.msra.mxu0 0
        %582 = vmatprep.subr.bf16.mxu0 0
        %583 = vmatpush2.bf16.msra.mxu0 0
        %584 = vmatprep.mubr.bf16.mxu0 0
        %585 = vmatmul.mubr.bf16.gmra.mxu0 %v440
        %v586 = vpop.f32.mrf.mxu0
        %v587 = vadd.f32 0.0, %v586
        %v588 = vpop.f32.mrf.mxu0
        %v589 = vadd.f32 0.0, %v588
        %v590 = vpop.f32.mrf.mxu0
        %v591 = vadd.f32 0.0, %v590
        %v592 = vpop.f32.mrf.mxu0
        %v593 = vadd.f32 0.0, %v592
        %594 = vmatprep.mubr.bf16.mxu0 0
        %595 = vmatmul.mubr.bf16.gmra.mxu0 %v441
        %v596 = vpop.f32.mrf.mxu0
        %v597 = vadd.f32 0.0, %v596
        %v598 = vpop.f32.mrf.mxu0
        %v599 = vadd.f32 0.0, %v598
        %v600 = vpop.f32.mrf.mxu0
        %v601 = vadd.f32 0.0, %v600
        %v602 = vpop.f32.mrf.mxu0
        %v603 = vadd.f32 0.0, %v602
        %604 = vmatprep.mubr.bf16.mxu0 0
        %605 = vmatmul.mubr.bf16.gmra.mxu0 %v442
        %v606 = vpop.f32.mrf.mxu0
        %v607 = vadd.f32 0.0, %v606
        %v608 = vpop.f32.mrf.mxu0
        %v609 = vadd.f32 0.0, %v608
        %v610 = vpop.f32.mrf.mxu0
        %v611 = vadd.f32 0.0, %v610
        %v612 = vpop.f32.mrf.mxu0
        %v613 = vadd.f32 0.0, %v612
        %614 = vmatprep.mubr.bf16.mxu0 0
        %615 = vmatmul.mubr.bf16.gmra.mxu0 %v443
        %v616 = vpop.f32.mrf.mxu0
        %v617 = vadd.f32 0.0, %v616
        %v618 = vpop.f32.mrf.mxu0
        %v619 = vadd.f32 0.0, %v618
        %v620 = vpop.f32.mrf.mxu0
        %v621 = vadd.f32 0.0, %v620
        %v622 = vpop.f32.mrf.mxu0
        %v623 = vadd.f32 0.0, %v622
        %624 = vmatprep.mubr.bf16.mxu0 0
        %625 = vmatmul.mubr.bf16.gmra.mxu0 %v444
        %v626 = vpop.f32.mrf.mxu0
        %v627 = vadd.f32 0.0, %v626
        %v628 = vpop.f32.mrf.mxu0
        %v629 = vadd.f32 0.0, %v628
        %v630 = vpop.f32.mrf.mxu0
        %v631 = vadd.f32 0.0, %v630
        %v632 = vpop.f32.mrf.mxu0
        %v633 = vadd.f32 0.0, %v632
        %634 = vmatprep.mubr.bf16.mxu0 0
        %635 = vmatmul.mubr.bf16.gmra.mxu0 %v445
        %v636 = vpop.f32.mrf.mxu0
        %v637 = vadd.f32 0.0, %v636
        %v638 = vpop.f32.mrf.mxu0
        %v639 = vadd.f32 0.0, %v638
        %v640 = vpop.f32.mrf.mxu0
        %v641 = vadd.f32 0.0, %v640
        %v642 = vpop.f32.mrf.mxu0
        %v643 = vadd.f32 0.0, %v642
        %644 = vmatprep.mubr.bf16.mxu0 0
        %645 = vmatmul.mubr.bf16.gmra.mxu0 %v446
        %v646 = vpop.f32.mrf.mxu0
        %v647 = vadd.f32 0.0, %v646
        %v648 = vpop.f32.mrf.mxu0
        %v649 = vadd.f32 0.0, %v648
        %v650 = vpop.f32.mrf.mxu0
        %v651 = vadd.f32 0.0, %v650
        %v652 = vpop.f32.mrf.mxu0
        %v653 = vadd.f32 0.0, %v652
        %654 = vmatprep.mubr.bf16.mxu0 0
        %655 = vmatmul.mubr.bf16.gmra.mxu0 %v447
        %v656 = vpop.f32.mrf.mxu0
        %v657 = vadd.f32 0.0, %v656
        %v658 = vpop.f32.mrf.mxu0
        %v659 = vadd.f32 0.0, %v658
        %v660 = vpop.f32.mrf.mxu0
        %v661 = vadd.f32 0.0, %v660
        %v662 = vpop.f32.mrf.mxu0
        %v663 = vadd.f32 0.0, %v662
        %664 = vmatprep.mubr.bf16.mxu0 0
        %665 = vmatmul.mubr.bf16.gmra.mxu0 %v448
        %v666 = vpop.f32.mrf.mxu0
        %v667 = vadd.f32 0.0, %v666
        %v668 = vpop.f32.mrf.mxu0
        %v669 = vadd.f32 0.0, %v668
        %v670 = vpop.f32.mrf.mxu0
        %v671 = vadd.f32 0.0, %v670
        %v672 = vpop.f32.mrf.mxu0
        %v673 = vadd.f32 0.0, %v672
        %674 = vmatprep.mubr.bf16.mxu0 0
        %675 = vmatmul.mubr.bf16.gmra.mxu0 %v449
        %v676 = vpop.f32.mrf.mxu0
        %v677 = vadd.f32 0.0, %v676
        %v678 = vpop.f32.mrf.mxu0
        %v679 = vadd.f32 0.0, %v678
        %v680 = vpop.f32.mrf.mxu0
        %v681 = vadd.f32 0.0, %v680
        %v682 = vpop.f32.mrf.mxu0
        %v683 = vadd.f32 0.0, %v682
        %684 = vmatprep.mubr.bf16.mxu0 0
        %685 = vmatmul.mubr.bf16.gmra.mxu0 %v450
        %v686 = vpop.f32.mrf.mxu0
        %v687 = vadd.f32 0.0, %v686
        %v688 = vpop.f32.mrf.mxu0
        %v689 = vadd.f32 0.0, %v688
        %v690 = vpop.f32.mrf.mxu0
        %v691 = vadd.f32 0.0, %v690
        %v692 = vpop.f32.mrf.mxu0
        %v693 = vadd.f32 0.0, %v692
        %694 = vmatprep.mubr.bf16.mxu0 0
        %695 = vmatmul.mubr.bf16.gmra.mxu0 %v451
        %v696 = vpop.f32.mrf.mxu0
        %v697 = vadd.f32 0.0, %v696
        %v698 = vpop.f32.mrf.mxu0
        %v699 = vadd.f32 0.0, %v698
        %v700 = vpop.f32.mrf.mxu0
        %v701 = vadd.f32 0.0, %v700
        %v702 = vpop.f32.mrf.mxu0
        %v703 = vadd.f32 0.0, %v702
        %704 = vmatprep.mubr.bf16.mxu0 0
        %705 = vmatmul.mubr.bf16.gmra.mxu0 %v452
        %v706 = vpop.f32.mrf.mxu0
        %v707 = vadd.f32 0.0, %v706
        %v708 = vpop.f32.mrf.mxu0
        %v709 = vadd.f32 0.0, %v708
        %v710 = vpop.f32.mrf.mxu0
        %v711 = vadd.f32 0.0, %v710
        %v712 = vpop.f32.mrf.mxu0
        %v713 = vadd.f32 0.0, %v712
        %714 = vmatprep.mubr.bf16.mxu0 0
        %715 = vmatmul.mubr.bf16.gmra.mxu0 %v453
        %v716 = vpop.f32.mrf.mxu0
        %v717 = vadd.f32 0.0, %v716
        %v718 = vpop.f32.mrf.mxu0
        %v719 = vadd.f32 0.0, %v718
        %v720 = vpop.f32.mrf.mxu0
        %v721 = vadd.f32 0.0, %v720
        %v722 = vpop.f32.mrf.mxu0
        %v723 = vadd.f32 0.0, %v722
        %724 = vmatprep.mubr.bf16.mxu0 0
        %725 = vmatmul.mubr.bf16.gmra.mxu0 %v454
        %v726 = vpop.f32.mrf.mxu0
        %v727 = vadd.f32 0.0, %v726
        %v728 = vpop.f32.mrf.mxu0
        %v729 = vadd.f32 0.0, %v728
        %v730 = vpop.f32.mrf.mxu0
        %v731 = vadd.f32 0.0, %v730
        %v732 = vpop.f32.mrf.mxu0
        %v733 = vadd.f32 0.0, %v732
        %734 = vmatprep.mubr.bf16.mxu0 0
        %735 = vmatmul.mubr.bf16.gmra.mxu0 %v455
        %v736 = vpop.f32.mrf.mxu0
        %v737 = vadd.f32 0.0, %v736
        %v738 = vpop.f32.mrf.mxu0
        %v739 = vadd.f32 0.0, %v738
        %v740 = vpop.f32.mrf.mxu0
        %v741 = vadd.f32 0.0, %v740
        %v742 = vpop.f32.mrf.mxu0
        %v743 = vadd.f32 0.0, %v742
        %744 = vdwg.mxu0
        %s745 = smul.u32 %s30, 256
        %s746 = sshra.s32 %s745, 3
        %s747 = sand.u32 %s745, 7
        %s748 = smul.u32 %s746, 2
        %s749 = smul.addr %s748, 8
        %s750 = scalar_lea.vmem [#allocation3], %s749
        %751 = vst [vmem:[%s750] sm:$0xff] %v587
        %752 = vst [vmem:[%s750 + $0x8] sm:$0xff] %v589
        %753 = vst [vmem:[%s750 + $0x10] sm:$0xff] %v591
        %754 = vst [vmem:[%s750 + $0x18] sm:$0xff] %v593
        %755 = vst [vmem:[%s750 + $0x20] sm:$0xff] %v597
        %756 = vst [vmem:[%s750 + $0x28] sm:$0xff] %v599
        %757 = vst [vmem:[%s750 + $0x30] sm:$0xff] %v601
        %758 = vst [vmem:[%s750 + $0x38] sm:$0xff] %v603
        %759 = vst [vmem:[%s750 + $0x40] sm:$0xff] %v607
        %760 = vst [vmem:[%s750 + $0x48] sm:$0xff] %v609
        %761 = vst [vmem:[%s750 + $0x50] sm:$0xff] %v611
        %762 = vst [vmem:[%s750 + $0x58] sm:$0xff] %v613
        %763 = vst [vmem:[%s750 + $0x60] sm:$0xff] %v617
        %764 = vst [vmem:[%s750 + $0x68] sm:$0xff] %v619
        %765 = vst [vmem:[%s750 + $0x70] sm:$0xff] %v621
        %766 = vst [vmem:[%s750 + $0x78] sm:$0xff] %v623
        %767 = vst [vmem:[%s750 + $0x80] sm:$0xff] %v627
        %768 = vst [vmem:[%s750 + $0x88] sm:$0xff] %v629
        %769 = vst [vmem:[%s750 + $0x90] sm:$0xff] %v631
        %770 = vst [vmem:[%s750 + $0x98] sm:$0xff] %v633
        %771 = vst [vmem:[%s750 + $0xa0] sm:$0xff] %v637
        %772 = vst [vmem:[%s750 + $0xa8] sm:$0xff] %v639
        %773 = vst [vmem:[%s750 + $0xb0] sm:$0xff] %v641
        %774 = vst [vmem:[%s750 + $0xb8] sm:$0xff] %v643
        %775 = vst [vmem:[%s750 + $0xc0] sm:$0xff] %v647
        %776 = vst [vmem:[%s750 + $0xc8] sm:$0xff] %v649
        %777 = vst [vmem:[%s750 + $0xd0] sm:$0xff] %v651
        %778 = vst [vmem:[%s750 + $0xd8] sm:$0xff] %v653
        %779 = vst [vmem:[%s750 + $0xe0] sm:$0xff] %v657
        %780 = vst [vmem:[%s750 + $0xe8] sm:$0xff] %v659
        %781 = vst [vmem:[%s750 + $0xf0] sm:$0xff] %v661
        %782 = vst [vmem:[%s750 + $0xf8] sm:$0xff] %v663
        %783 = vst [vmem:[%s750 + $0x100] sm:$0xff] %v667
        %784 = vst [vmem:[%s750 + $0x108] sm:$0xff] %v669
        %785 = vst [vmem:[%s750 + $0x110] sm:$0xff] %v671
        %786 = vst [vmem:[%s750 + $0x118] sm:$0xff] %v673
        %787 = vst [vmem:[%s750 + $0x120] sm:$0xff] %v677
        %788 = vst [vmem:[%s750 + $0x128] sm:$0xff] %v679
        %789 = vst [vmem:[%s750 + $0x130] sm:$0xff] %v681
        %790 = vst [vmem:[%s750 + $0x138] sm:$0xff] %v683
        %791 = vst [vmem:[%s750 + $0x140] sm:$0xff] %v687
        %792 = vst [vmem:[%s750 + $0x148] sm:$0xff] %v689
        %793 = vst [vmem:[%s750 + $0x150] sm:$0xff] %v691
        %794 = vst [vmem:[%s750 + $0x158] sm:$0xff] %v693
        %795 = vst [vmem:[%s750 + $0x160] sm:$0xff] %v697
        %796 = vst [vmem:[%s750 + $0x168] sm:$0xff] %v699
        %797 = vst [vmem:[%s750 + $0x170] sm:$0xff] %v701
        %798 = vst [vmem:[%s750 + $0x178] sm:$0xff] %v703
        %799 = vst [vmem:[%s750 + $0x180] sm:$0xff] %v707
        %800 = vst [vmem:[%s750 + $0x188] sm:$0xff] %v709
        %801 = vst [vmem:[%s750 + $0x190] sm:$0xff] %v711
        %802 = vst [vmem:[%s750 + $0x198] sm:$0xff] %v713
        %803 = vst [vmem:[%s750 + $0x1a0] sm:$0xff] %v717
        %804 = vst [vmem:[%s750 + $0x1a8] sm:$0xff] %v719
        %805 = vst [vmem:[%s750 + $0x1b0] sm:$0xff] %v721
        %806 = vst [vmem:[%s750 + $0x1b8] sm:$0xff] %v723
        %807 = vst [vmem:[%s750 + $0x1c0] sm:$0xff] %v727
        %808 = vst [vmem:[%s750 + $0x1c8] sm:$0xff] %v729
        %809 = vst [vmem:[%s750 + $0x1d0] sm:$0xff] %v731
        %810 = vst [vmem:[%s750 + $0x1d8] sm:$0xff] %v733
        %811 = vst [vmem:[%s750 + $0x1e0] sm:$0xff] %v737
        %812 = vst [vmem:[%s750 + $0x1e8] sm:$0xff] %v739
        %813 = vst [vmem:[%s750 + $0x1f0] sm:$0xff] %v741
        %814 = vst [vmem:[%s750 + $0x1f8] sm:$0xff] %v743
        %v815 = vld [vmem:[#allocation2] sm:$0x3]
        %v816 = vadd.f32 %v587, %v591
        %v817 = vadd.f32 %v816, %v597
        %v818 = vadd.f32 %v817, %v601
        %v819 = vadd.f32 %v818, %v607
        %v820 = vadd.f32 %v819, %v611
        %v821 = vadd.f32 %v820, %v617
        %v822 = vadd.f32 %v821, %v621
        %v823 = vadd.f32 %v822, %v627
        %v824 = vadd.f32 %v823, %v631
        %v825 = vadd.f32 %v824, %v637
        %v826 = vadd.f32 %v825, %v641
        %v827 = vadd.f32 %v826, %v647
        %v828 = vadd.f32 %v827, %v651
        %v829 = vadd.f32 %v828, %v657
        %v830 = vadd.f32 %v829, %v661
        %v831 = vadd.f32 %v830, %v667
        %v832 = vadd.f32 %v831, %v671
        %v833 = vadd.f32 %v832, %v677
        %v834 = vadd.f32 %v833, %v681
        %v835 = vadd.f32 %v834, %v687
        %v836 = vadd.f32 %v835, %v691
        %v837 = vadd.f32 %v836, %v697
        %v838 = vadd.f32 %v837, %v701
        %v839 = vadd.f32 %v838, %v707
        %v840 = vadd.f32 %v839, %v711
        %v841 = vadd.f32 %v840, %v717
        %v842 = vadd.f32 %v841, %v721
        %v843 = vadd.f32 %v842, %v727
        %v844 = vadd.f32 %v843, %v731
        %v845 = vadd.f32 %v844, %v737
        %v846 = vadd.f32 %v845, %v741
        %v847 = vrot.slane %v846, 4
        %v848 = vadd.f32 %v846, %v847
        %v849 = vrot.slane %v848, 2
        %v850 = vadd.f32 %v848, %v849
        %v851 = vrot.slane %v850, 1
        %v852 = vadd.f32 %v850, %v851
        %v853 = vadd.f32 %v589, %v593
        %v854 = vadd.f32 %v853, %v599
        %v855 = vadd.f32 %v854, %v603
        %v856 = vadd.f32 %v855, %v609
        %v857 = vadd.f32 %v856, %v613
        %v858 = vadd.f32 %v857, %v619
        %v859 = vadd.f32 %v858, %v623
        %v860 = vadd.f32 %v859, %v629
        %v861 = vadd.f32 %v860, %v633
        %v862 = vadd.f32 %v861, %v639
        %v863 = vadd.f32 %v862, %v643
        %v864 = vadd.f32 %v863, %v649
        %v865 = vadd.f32 %v864, %v653
        %v866 = vadd.f32 %v865, %v659
        %v867 = vadd.f32 %v866, %v663
        %v868 = vadd.f32 %v867, %v669
        %v869 = vadd.f32 %v868, %v673
        %v870 = vadd.f32 %v869, %v679
        %v871 = vadd.f32 %v870, %v683
        %v872 = vadd.f32 %v871, %v689
        %v873 = vadd.f32 %v872, %v693
        %v874 = vadd.f32 %v873, %v699
        %v875 = vadd.f32 %v874, %v703
        %v876 = vadd.f32 %v875, %v709
        %v877 = vadd.f32 %v876, %v713
        %v878 = vadd.f32 %v877, %v719
        %v879 = vadd.f32 %v878, %v723
        %v880 = vadd.f32 %v879, %v729
        %v881 = vadd.f32 %v880, %v733
        %v882 = vadd.f32 %v881, %v739
        %v883 = vadd.f32 %v882, %v743
        %v884 = vrot.slane %v883, 4
        %v885 = vadd.f32 %v883, %v884
        %v886 = vrot.slane %v885, 2
        %v887 = vadd.f32 %v885, %v886
        %v888 = vrot.slane %v887, 1
        %v889 = vadd.f32 %v887, %v888
        %v892 = vcombine.low %v852, %v889
        %v894 = vunpack.c.l.s4 1966171168
        %v895 = vunpack.c.0.s8 %v894
        %v896 = vlaneseq
        %v897 = vshrl.u32 %v896, 7
        %v898 = vsub.s32 %v895, %v897
        %v899 = vrot.slane %v892, %v898
        %v901 = vunpack.c.l.s4 1966171168
        %v902 = vunpack.c.0.s8 %v901
        %v903 = vlaneseq
        %v904 = vshrl.u32 %v903, 7
        %v905 = vsub.s32 %v902, %v904
        %v906 = vrot.slane %v899, %v905
        %v908 = vadd.f32 %v815, %v906
        %v909 = vlaneseq
        %vm910 = vcmp.ge.s32.totalorder %v909, 0
        %vm911 = vcmp.lt.s32.totalorder %v909, 256
        %vm912 = vmand %vm910, %vm911
        %913 = vst.msk [vmem:[#allocation2] sm:$0x3] %vm912, %v908
        // Predicated region
        $region57: #{tpu_custom_call.1} parent=35 // pred_check
          %p914 = pneg %p319
        $region58: #{tpu_custom_call.1} parent=35 // pred_check_branch
          %916 = sbr.rel (%p914) target = $region60
        $region59: #{tpu_custom_call.1} parent=35 // pred_region
          %v917 = vld [vmem:[#allocation9] ss:$4 sm:$0x3]
          %s918 = scalar_lea.vmem [#allocation9], 1
          %v919 = vld [vmem:[%s918] ss:$4 sm:$0x3]
          %s920 = scalar_lea.vmem [#allocation9], 2
          %v921 = vld [vmem:[%s920] ss:$4 sm:$0x3]
          %v922 = vld [vmem:[#allocation2] sm:$0x3]
          %v923 = vmul.f32 %v922, 0.00390625
          %v924 = vadd.f32 %v923, %v917
          %v926 = vlaneseq
          %v927 = vshrl.u32 %v926, 7
          %v928 = vsub.s32 0, %v927
          %v929 = vrot.slane %v924, %v928
          %v930 = vlaneseq
          %v931 = vshrl.u32 %v930, 7
          %v932 = vsub.s32 1, %v931
          %v933 = vrot.slane %v924, %v932
          %v936 = vpack.c.bf16 %v929, %v929
          %v937 = vpack.c.bf16 %v933, %v933
          %v938 = vld [vmem:[#allocation10] sm:$0xff]
          %v939 = vld [vmem:[#allocation10 + $0x8] sm:$0xff]
          %v940 = vld [vmem:[#allocation10 + $0x10] sm:$0xff]
          %v941 = vld [vmem:[#allocation10 + $0x18] sm:$0xff]
          %v942 = vld [vmem:[#allocation10 + $0x20] sm:$0xff]
          %v943 = vld [vmem:[#allocation10 + $0x28] sm:$0xff]
          %v944 = vld [vmem:[#allocation10 + $0x30] sm:$0xff]
          %v945 = vld [vmem:[#allocation10 + $0x38] sm:$0xff]
          %v946 = vld [vmem:[#allocation10 + $0x40] sm:$0xff]
          %v947 = vld [vmem:[#allocation10 + $0x48] sm:$0xff]
          %v948 = vld [vmem:[#allocation10 + $0x50] sm:$0xff]
          %v949 = vld [vmem:[#allocation10 + $0x58] sm:$0xff]
          %v950 = vld [vmem:[#allocation10 + $0x60] sm:$0xff]
          %v951 = vld [vmem:[#allocation10 + $0x68] sm:$0xff]
          %v952 = vld [vmem:[#allocation10 + $0x70] sm:$0xff]
          %v953 = vld [vmem:[#allocation10 + $0x78] sm:$0xff]
          %v954 = vld [vmem:[#allocation10 + $0x80] sm:$0xff]
          %v955 = vld [vmem:[#allocation10 + $0x88] sm:$0xff]
          %v956 = vld [vmem:[#allocation10 + $0x90] sm:$0xff]
          %v957 = vld [vmem:[#allocation10 + $0x98] sm:$0xff]
          %v958 = vld [vmem:[#allocation10 + $0xa0] sm:$0xff]
          %v959 = vld [vmem:[#allocation10 + $0xa8] sm:$0xff]
          %v960 = vld [vmem:[#allocation10 + $0xb0] sm:$0xff]
          %v961 = vld [vmem:[#allocation10 + $0xb8] sm:$0xff]
          %v962 = vld [vmem:[#allocation10 + $0xc0] sm:$0xff]
          %v963 = vld [vmem:[#allocation10 + $0xc8] sm:$0xff]
          %v964 = vld [vmem:[#allocation10 + $0xd0] sm:$0xff]
          %v965 = vld [vmem:[#allocation10 + $0xd8] sm:$0xff]
          %v966 = vld [vmem:[#allocation10 + $0xe0] sm:$0xff]
          %v967 = vld [vmem:[#allocation10 + $0xe8] sm:$0xff]
          %v968 = vld [vmem:[#allocation10 + $0xf0] sm:$0xff]
          %v969 = vld [vmem:[#allocation10 + $0xf8] sm:$0xff]
          %v1002 = vunpack.c.l.b16 %v938
          %v1003 = vunpack.c.h.b16 %v938
          %v1004 = vunpack.c.l.b16 %v939
          %v1005 = vunpack.c.h.b16 %v939
          %v1006 = vunpack.c.l.b16 %v940
          %v1007 = vunpack.c.h.b16 %v940
          %v1008 = vunpack.c.l.b16 %v941
          %v1009 = vunpack.c.h.b16 %v941
          %v1010 = vunpack.c.l.b16 %v942
          %v1011 = vunpack.c.h.b16 %v942
          %v1012 = vunpack.c.l.b16 %v943
          %v1013 = vunpack.c.h.b16 %v943
          %v1014 = vunpack.c.l.b16 %v944
          %v1015 = vunpack.c.h.b16 %v944
          %v1016 = vunpack.c.l.b16 %v945
          %v1017 = vunpack.c.h.b16 %v945
          %v1018 = vunpack.c.l.b16 %v946
          %v1019 = vunpack.c.h.b16 %v946
          %v1020 = vunpack.c.l.b16 %v947
          %v1021 = vunpack.c.h.b16 %v947
          %v1022 = vunpack.c.l.b16 %v948
          %v1023 = vunpack.c.h.b16 %v948
          %v1024 = vunpack.c.l.b16 %v949
          %v1025 = vunpack.c.h.b16 %v949
          %v1026 = vunpack.c.l.b16 %v950
          %v1027 = vunpack.c.h.b16 %v950
          %v1028 = vunpack.c.l.b16 %v951
          %v1029 = vunpack.c.h.b16 %v951
          %v1030 = vunpack.c.l.b16 %v952
          %v1031 = vunpack.c.h.b16 %v952
          %v1032 = vunpack.c.l.b16 %v953
          %v1033 = vunpack.c.h.b16 %v953
          %v1034 = vunpack.c.l.b16 %v954
          %v1035 = vunpack.c.h.b16 %v954
          %v1036 = vunpack.c.l.b16 %v955
          %v1037 = vunpack.c.h.b16 %v955
          %v1038 = vunpack.c.l.b16 %v956
          %v1039 = vunpack.c.h.b16 %v956
          %v1040 = vunpack.c.l.b16 %v957
          %v1041 = vunpack.c.h.b16 %v957
          %v1042 = vunpack.c.l.b16 %v958
          %v1043 = vunpack.c.h.b16 %v958
          %v1044 = vunpack.c.l.b16 %v959
          %v1045 = vunpack.c.h.b16 %v959
          %v1046 = vunpack.c.l.b16 %v960
          %v1047 = vunpack.c.h.b16 %v960
          %v1048 = vunpack.c.l.b16 %v961
          %v1049 = vunpack.c.h.b16 %v961
          %v1050 = vunpack.c.l.b16 %v962
          %v1051 = vunpack.c.h.b16 %v962
          %v1052 = vunpack.c.l.b16 %v963
          %v1053 = vunpack.c.h.b16 %v963
          %v1054 = vunpack.c.l.b16 %v964
          %v1055 = vunpack.c.h.b16 %v964
          %v1056 = vunpack.c.l.b16 %v965
          %v1057 = vunpack.c.h.b16 %v965
          %v1058 = vunpack.c.l.b16 %v966
          %v1059 = vunpack.c.h.b16 %v966
          %v1060 = vunpack.c.l.b16 %v967
          %v1061 = vunpack.c.h.b16 %v967
          %v1062 = vunpack.c.l.b16 %v968
          %v1063 = vunpack.c.h.b16 %v968
          %v1064 = vunpack.c.l.b16 %v969
          %v1065 = vunpack.c.h.b16 %v969
          %v1066 = vpack.c.b16 %v1004, %v1002
          %v1067 = vpack.c.b16 %v1005, %v1003
          %v1068 = vpack.c.b16 %v1008, %v1006
          %v1069 = vpack.c.b16 %v1009, %v1007
          %v1070 = vpack.c.b16 %v1012, %v1010
          %v1071 = vpack.c.b16 %v1013, %v1011
          %v1072 = vpack.c.b16 %v1016, %v1014
          %v1073 = vpack.c.b16 %v1017, %v1015
          %v1074 = vpack.c.b16 %v1020, %v1018
          %v1075 = vpack.c.b16 %v1021, %v1019
          %v1076 = vpack.c.b16 %v1024, %v1022
          %v1077 = vpack.c.b16 %v1025, %v1023
          %v1078 = vpack.c.b16 %v1028, %v1026
          %v1079 = vpack.c.b16 %v1029, %v1027
          %v1080 = vpack.c.b16 %v1032, %v1030
          %v1081 = vpack.c.b16 %v1033, %v1031
          %v1082 = vpack.c.b16 %v1036, %v1034
          %v1083 = vpack.c.b16 %v1037, %v1035
          %v1084 = vpack.c.b16 %v1040, %v1038
          %v1085 = vpack.c.b16 %v1041, %v1039
          %v1086 = vpack.c.b16 %v1044, %v1042
          %v1087 = vpack.c.b16 %v1045, %v1043
          %v1088 = vpack.c.b16 %v1048, %v1046
          %v1089 = vpack.c.b16 %v1049, %v1047
          %v1090 = vpack.c.b16 %v1052, %v1050
          %v1091 = vpack.c.b16 %v1053, %v1051
          %v1092 = vpack.c.b16 %v1056, %v1054
          %v1093 = vpack.c.b16 %v1057, %v1055
          %v1094 = vpack.c.b16 %v1060, %v1058
          %v1095 = vpack.c.b16 %v1061, %v1059
          %v1096 = vpack.c.b16 %v1064, %v1062
          %v1097 = vpack.c.b16 %v1065, %v1063
          %1130 = vmatprep.subr.bf16.mxu0 %v1081
          %1131 = vmatpush1.bf16.msra.mxu0 %v1080
          %1132 = vmatprep.subr.bf16.mxu0 %v1079
          %1133 = vmatpush1.bf16.msra.mxu0 %v1078
          %1134 = vmatprep.subr.bf16.mxu0 %v1077
          %1135 = vmatpush1.bf16.msra.mxu0 %v1076
          %1136 = vmatprep.subr.bf16.mxu0 %v1075
          %1137 = vmatpush1.bf16.msra.mxu0 %v1074
          %1138 = vmatprep.subr.bf16.mxu0 %v1073
          %1139 = vmatpush1.bf16.msra.mxu0 %v1072
          %1140 = vmatprep.subr.bf16.mxu0 %v1071
          %1141 = vmatpush1.bf16.msra.mxu0 %v1070
          %1142 = vmatprep.subr.bf16.mxu0 %v1069
          %1143 = vmatpush1.bf16.msra.mxu0 %v1068
          %1144 = vmatprep.subr.bf16.mxu0 %v1067
          %1145 = vmatpush1.bf16.msra.mxu0 %v1066
          %1146 = vmatprep.subr.bf16.mxu0 %v1097
          %1147 = vmatpush2.bf16.msra.mxu0 %v1096
          %1148 = vmatprep.subr.bf16.mxu0 %v1095
          %1149 = vmatpush2.bf16.msra.mxu0 %v1094
          %1150 = vmatprep.subr.bf16.mxu0 %v1093
          %1151 = vmatpush2.bf16.msra.mxu0 %v1092
          %1152 = vmatprep.subr.bf16.mxu0 %v1091
          %1153 = vmatpush2.bf16.msra.mxu0 %v1090
          %1154 = vmatprep.subr.bf16.mxu0 %v1089
          %1155 = vmatpush2.bf16.msra.mxu0 %v1088
          %1156 = vmatprep.subr.bf16.mxu0 %v1087
          %1157 = vmatpush2.bf16.msra.mxu0 %v1086
          %1158 = vmatprep.subr.bf16.mxu0 %v1085
          %1159 = vmatpush2.bf16.msra.mxu0 %v1084
          %1160 = vmatprep.subr.bf16.mxu0 %v1083
          %1161 = vmatpush2.bf16.msra.mxu0 %v1082
          %1162 = vmatprep.mubr.bf16.mxu0 %v937
          %1163 = vmatmul.mubr.bf16.gmra.mxu0 %v936
          %v1164 = vpop.f32.mrf.mxu0
          %v1165 = vadd.f32 0.0, %v1164
          %v1166 = vpop.f32.mrf.mxu0
          %v1167 = vadd.f32 0.0, %v1166
          %v1168 = vpop.f32.mrf.mxu0
          %v1169 = vpop.f32.mrf.mxu0
          %1170 = vdwg.mxu0
          %v1172 = vlaneseq
          %v1173 = vshrl.u32 %v1172, 7
          %v1174 = vsub.s32 0, %v1173
          %v1175 = vrot.slane %v917, %v1174
          %v1176 = vlaneseq
          %v1177 = vshrl.u32 %v1176, 7
          %v1178 = vsub.s32 1, %v1177
          %v1179 = vrot.slane %v917, %v1178
          %v1182 = vsub.f32 %v1165, %v1175
          %v1183 = vsub.f32 %v1167, %v1179
          %s1184 = smul.u32 0, 2
          %s1185 = smul.addr %s1184, 8
          %s1186 = scalar_lea.vmem [#allocation3], %s1185
          %v1187 = vld [vmem:[%s1186] sm:$0xff]
          %v1188 = vld [vmem:[%s1186 + $0x8] sm:$0xff]
          %v1189 = vld [vmem:[%s1186 + $0x10] sm:$0xff]
          %v1190 = vld [vmem:[%s1186 + $0x18] sm:$0xff]
          %v1191 = vld [vmem:[%s1186 + $0x20] sm:$0xff]
          %v1192 = vld [vmem:[%s1186 + $0x28] sm:$0xff]
          %v1193 = vld [vmem:[%s1186 + $0x30] sm:$0xff]
          %v1194 = vld [vmem:[%s1186 + $0x38] sm:$0xff]
          %v1195 = vld [vmem:[%s1186 + $0x40] sm:$0xff]
          %v1196 = vld [vmem:[%s1186 + $0x48] sm:$0xff]
          %v1197 = vld [vmem:[%s1186 + $0x50] sm:$0xff]
          %v1198 = vld [vmem:[%s1186 + $0x58] sm:$0xff]
          %v1199 = vld [vmem:[%s1186 + $0x60] sm:$0xff]
          %v1200 = vld [vmem:[%s1186 + $0x68] sm:$0xff]
          %v1201 = vld [vmem:[%s1186 + $0x70] sm:$0xff]
          %v1202 = vld [vmem:[%s1186 + $0x78] sm:$0xff]
          %v1203 = vld [vmem:[%s1186 + $0x80] sm:$0xff]
          %v1204 = vld [vmem:[%s1186 + $0x88] sm:$0xff]
          %v1205 = vld [vmem:[%s1186 + $0x90] sm:$0xff]
          %v1206 = vld [vmem:[%s1186 + $0x98] sm:$0xff]
          %v1207 = vld [vmem:[%s1186 + $0xa0] sm:$0xff]
          %v1208 = vld [vmem:[%s1186 + $0xa8] sm:$0xff]
          %v1209 = vld [vmem:[%s1186 + $0xb0] sm:$0xff]
          %v1210 = vld [vmem:[%s1186 + $0xb8] sm:$0xff]
          %v1211 = vld [vmem:[%s1186 + $0xc0] sm:$0xff]
          %v1212 = vld [vmem:[%s1186 + $0xc8] sm:$0xff]
          %v1213 = vld [vmem:[%s1186 + $0xd0] sm:$0xff]
          %v1214 = vld [vmem:[%s1186 + $0xd8] sm:$0xff]
          %v1215 = vld [vmem:[%s1186 + $0xe0] sm:$0xff]
          %v1216 = vld [vmem:[%s1186 + $0xe8] sm:$0xff]
          %v1217 = vld [vmem:[%s1186 + $0xf0] sm:$0xff]
          %v1218 = vld [vmem:[%s1186 + $0xf8] sm:$0xff]
          %v1219 = vld [vmem:[%s1186 + $0x100] sm:$0xff]
          %v1220 = vld [vmem:[%s1186 + $0x108] sm:$0xff]
          %v1221 = vld [vmem:[%s1186 + $0x110] sm:$0xff]
          %v1222 = vld [vmem:[%s1186 + $0x118] sm:$0xff]
          %v1223 = vld [vmem:[%s1186 + $0x120] sm:$0xff]
          %v1224 = vld [vmem:[%s1186 + $0x128] sm:$0xff]
          %v1225 = vld [vmem:[%s1186 + $0x130] sm:$0xff]
          %v1226 = vld [vmem:[%s1186 + $0x138] sm:$0xff]
          %v1227 = vld [vmem:[%s1186 + $0x140] sm:$0xff]
          %v1228 = vld [vmem:[%s1186 + $0x148] sm:$0xff]
          %v1229 = vld [vmem:[%s1186 + $0x150] sm:$0xff]
          %v1230 = vld [vmem:[%s1186 + $0x158] sm:$0xff]
          %v1231 = vld [vmem:[%s1186 + $0x160] sm:$0xff]
          %v1232 = vld [vmem:[%s1186 + $0x168] sm:$0xff]
          %v1233 = vld [vmem:[%s1186 + $0x170] sm:$0xff]
          %v1234 = vld [vmem:[%s1186 + $0x178] sm:$0xff]
          %v1235 = vld [vmem:[%s1186 + $0x180] sm:$0xff]
          %v1236 = vld [vmem:[%s1186 + $0x188] sm:$0xff]
          %v1237 = vld [vmem:[%s1186 + $0x190] sm:$0xff]
          %v1238 = vld [vmem:[%s1186 + $0x198] sm:$0xff]
          %v1239 = vld [vmem:[%s1186 + $0x1a0] sm:$0xff]
          %v1240 = vld [vmem:[%s1186 + $0x1a8] sm:$0xff]
          %v1241 = vld [vmem:[%s1186 + $0x1b0] sm:$0xff]
          %v1242 = vld [vmem:[%s1186 + $0x1b8] sm:$0xff]
          %v1243 = vld [vmem:[%s1186 + $0x1c0] sm:$0xff]
          %v1244 = vld [vmem:[%s1186 + $0x1c8] sm:$0xff]
          %v1245 = vld [vmem:[%s1186 + $0x1d0] sm:$0xff]
          %v1246 = vld [vmem:[%s1186 + $0x1d8] sm:$0xff]
          %v1247 = vld [vmem:[%s1186 + $0x1e0] sm:$0xff]
          %v1248 = vld [vmem:[%s1186 + $0x1e8] sm:$0xff]
          %v1249 = vld [vmem:[%s1186 + $0x1f0] sm:$0xff]
          %v1250 = vld [vmem:[%s1186 + $0x1f8] sm:$0xff]
          %v1251 = vlaneseq
          %v1252 = vshrl.u32 %v1251, 7
          %v1253 = vsub.s32 0, %v1252
          %v1254 = vrot.slane %v1182, %v1253
          %v1255 = vlaneseq
          %v1256 = vshrl.u32 %v1255, 7
          %v1257 = vsub.s32 0, %v1256
          %v1258 = vrot.slane %v1183, %v1257
          %v1259 = vsub.f32 %v1187, %v1254
          %v1260 = vsub.f32 %v1188, %v1258
          %v1261 = vsub.f32 %v1189, %v1254
          %v1262 = vsub.f32 %v1190, %v1258
          %v1263 = vsub.f32 %v1191, %v1254
          %v1264 = vsub.f32 %v1192, %v1258
          %v1265 = vsub.f32 %v1193, %v1254
          %v1266 = vsub.f32 %v1194, %v1258
          %v1267 = vsub.f32 %v1195, %v1254
          %v1268 = vsub.f32 %v1196, %v1258
          %v1269 = vsub.f32 %v1197, %v1254
          %v1270 = vsub.f32 %v1198, %v1258
          %v1271 = vsub.f32 %v1199, %v1254
          %v1272 = vsub.f32 %v1200, %v1258
          %v1273 = vsub.f32 %v1201, %v1254
          %v1274 = vsub.f32 %v1202, %v1258
          %v1275 = vsub.f32 %v1203, %v1254
          %v1276 = vsub.f32 %v1204, %v1258
          %v1277 = vsub.f32 %v1205, %v1254
          %v1278 = vsub.f32 %v1206, %v1258
          %v1279 = vsub.f32 %v1207, %v1254
          %v1280 = vsub.f32 %v1208, %v1258
          %v1281 = vsub.f32 %v1209, %v1254
          %v1282 = vsub.f32 %v1210, %v1258
          %v1283 = vsub.f32 %v1211, %v1254
          %v1284 = vsub.f32 %v1212, %v1258
          %v1285 = vsub.f32 %v1213, %v1254
          %v1286 = vsub.f32 %v1214, %v1258
          %v1287 = vsub.f32 %v1215, %v1254
          %v1288 = vsub.f32 %v1216, %v1258
          %v1289 = vsub.f32 %v1217, %v1254
          %v1290 = vsub.f32 %v1218, %v1258
          %v1291 = vsub.f32 %v1219, %v1254
          %v1292 = vsub.f32 %v1220, %v1258
          %v1293 = vsub.f32 %v1221, %v1254
          %v1294 = vsub.f32 %v1222, %v1258
          %v1295 = vsub.f32 %v1223, %v1254
          %v1296 = vsub.f32 %v1224, %v1258
          %v1297 = vsub.f32 %v1225, %v1254
          %v1298 = vsub.f32 %v1226, %v1258
          %v1299 = vsub.f32 %v1227, %v1254
          %v1300 = vsub.f32 %v1228, %v1258
          %v1301 = vsub.f32 %v1229, %v1254
          %v1302 = vsub.f32 %v1230, %v1258
          %v1303 = vsub.f32 %v1231, %v1254
          %v1304 = vsub.f32 %v1232, %v1258
          %v1305 = vsub.f32 %v1233, %v1254
          %v1306 = vsub.f32 %v1234, %v1258
          %v1307 = vsub.f32 %v1235, %v1254
          %v1308 = vsub.f32 %v1236, %v1258
          %v1309 = vsub.f32 %v1237, %v1254
          %v1310 = vsub.f32 %v1238, %v1258
          %v1311 = vsub.f32 %v1239, %v1254
          %v1312 = vsub.f32 %v1240, %v1258
          %v1313 = vsub.f32 %v1241, %v1254
          %v1314 = vsub.f32 %v1242, %v1258
          %v1315 = vsub.f32 %v1243, %v1254
          %v1316 = vsub.f32 %v1244, %v1258
          %v1317 = vsub.f32 %v1245, %v1254
          %v1318 = vsub.f32 %v1246, %v1258
          %v1319 = vsub.f32 %v1247, %v1254
          %v1320 = vsub.f32 %v1248, %v1258
          %v1321 = vsub.f32 %v1249, %v1254
          %v1322 = vsub.f32 %v1250, %v1258
          %v1323 = vmul.f32 %v1259, %v1259
          %v1324 = vmul.f32 %v1260, %v1260
          %v1325 = vmul.f32 %v1261, %v1261
          %v1326 = vmul.f32 %v1262, %v1262
          %v1327 = vmul.f32 %v1263, %v1263
          %v1328 = vmul.f32 %v1264, %v1264
          %v1329 = vmul.f32 %v1265, %v1265
          %v1330 = vmul.f32 %v1266, %v1266
          %v1331 = vmul.f32 %v1267, %v1267
          %v1332 = vmul.f32 %v1268, %v1268
          %v1333 = vmul.f32 %v1269, %v1269
          %v1334 = vmul.f32 %v1270, %v1270
          %v1335 = vmul.f32 %v1271, %v1271
          %v1336 = vmul.f32 %v1272, %v1272
          %v1337 = vmul.f32 %v1273, %v1273
          %v1338 = vmul.f32 %v1274, %v1274
          %v1339 = vmul.f32 %v1275, %v1275
          %v1340 = vmul.f32 %v1276, %v1276
          %v1341 = vmul.f32 %v1277, %v1277
          %v1342 = vmul.f32 %v1278, %v1278
          %v1343 = vmul.f32 %v1279, %v1279
          %v1344 = vmul.f32 %v1280, %v1280
          %v1345 = vmul.f32 %v1281, %v1281
          %v1346 = vmul.f32 %v1282, %v1282
          %v1347 = vmul.f32 %v1283, %v1283
          %v1348 = vmul.f32 %v1284, %v1284
          %v1349 = vmul.f32 %v1285, %v1285
          %v1350 = vmul.f32 %v1286, %v1286
          %v1351 = vmul.f32 %v1287, %v1287
          %v1352 = vmul.f32 %v1288, %v1288
          %v1353 = vmul.f32 %v1289, %v1289
          %v1354 = vmul.f32 %v1290, %v1290
          %v1355 = vmul.f32 %v1291, %v1291
          %v1356 = vmul.f32 %v1292, %v1292
          %v1357 = vmul.f32 %v1293, %v1293
          %v1358 = vmul.f32 %v1294, %v1294
          %v1359 = vmul.f32 %v1295, %v1295
          %v1360 = vmul.f32 %v1296, %v1296
          %v1361 = vmul.f32 %v1297, %v1297
          %v1362 = vmul.f32 %v1298, %v1298
          %v1363 = vmul.f32 %v1299, %v1299
          %v1364 = vmul.f32 %v1300, %v1300
          %v1365 = vmul.f32 %v1301, %v1301
          %v1366 = vmul.f32 %v1302, %v1302
          %v1367 = vmul.f32 %v1303, %v1303
          %v1368 = vmul.f32 %v1304, %v1304
          %v1369 = vmul.f32 %v1305, %v1305
          %v1370 = vmul.f32 %v1306, %v1306
          %v1371 = vmul.f32 %v1307, %v1307
          %v1372 = vmul.f32 %v1308, %v1308
          %v1373 = vmul.f32 %v1309, %v1309
          %v1374 = vmul.f32 %v1310, %v1310
          %v1375 = vmul.f32 %v1311, %v1311
          %v1376 = vmul.f32 %v1312, %v1312
          %v1377 = vmul.f32 %v1313, %v1313
          %v1378 = vmul.f32 %v1314, %v1314
          %v1379 = vmul.f32 %v1315, %v1315
          %v1380 = vmul.f32 %v1316, %v1316
          %v1381 = vmul.f32 %v1317, %v1317
          %v1382 = vmul.f32 %v1318, %v1318
          %v1383 = vmul.f32 %v1319, %v1319
          %v1384 = vmul.f32 %v1320, %v1320
          %v1385 = vmul.f32 %v1321, %v1321
          %v1386 = vmul.f32 %v1322, %v1322
          %v1387 = vadd.f32 %v1323, %v1325
          %v1388 = vadd.f32 %v1387, %v1327
          %v1389 = vadd.f32 %v1388, %v1329
          %v1390 = vadd.f32 %v1389, %v1331
          %v1391 = vadd.f32 %v1390, %v1333
          %v1392 = vadd.f32 %v1391, %v1335
          %v1393 = vadd.f32 %v1392, %v1337
          %v1394 = vadd.f32 %v1393, %v1339
          %v1395 = vadd.f32 %v1394, %v1341
          %v1396 = vadd.f32 %v1395, %v1343
          %v1397 = vadd.f32 %v1396, %v1345
          %v1398 = vadd.f32 %v1397, %v1347
          %v1399 = vadd.f32 %v1398, %v1349
          %v1400 = vadd.f32 %v1399, %v1351
          %v1401 = vadd.f32 %v1400, %v1353
          %v1402 = vadd.f32 %v1401, %v1355
          %v1403 = vadd.f32 %v1402, %v1357
          %v1404 = vadd.f32 %v1403, %v1359
          %v1405 = vadd.f32 %v1404, %v1361
          %v1406 = vadd.f32 %v1405, %v1363
          %v1407 = vadd.f32 %v1406, %v1365
          %v1408 = vadd.f32 %v1407, %v1367
          %v1409 = vadd.f32 %v1408, %v1369
          %v1410 = vadd.f32 %v1409, %v1371
          %v1411 = vadd.f32 %v1410, %v1373
          %v1412 = vadd.f32 %v1411, %v1375
          %v1413 = vadd.f32 %v1412, %v1377
          %v1414 = vadd.f32 %v1413, %v1379
          %v1415 = vadd.f32 %v1414, %v1381
          %v1416 = vadd.f32 %v1415, %v1383
          %v1417 = vadd.f32 %v1416, %v1385
          %v1418 = vrot.slane %v1417, 4
          %v1419 = vadd.f32 %v1417, %v1418
          %v1420 = vrot.slane %v1419, 2
          %v1421 = vadd.f32 %v1419, %v1420
          %v1422 = vrot.slane %v1421, 1
          %v1423 = vadd.f32 %v1421, %v1422
          %v1424 = vadd.f32 %v1324, %v1326
          %v1425 = vadd.f32 %v1424, %v1328
          %v1426 = vadd.f32 %v1425, %v1330
          %v1427 = vadd.f32 %v1426, %v1332
          %v1428 = vadd.f32 %v1427, %v1334
          %v1429 = vadd.f32 %v1428, %v1336
          %v1430 = vadd.f32 %v1429, %v1338
          %v1431 = vadd.f32 %v1430, %v1340
          %v1432 = vadd.f32 %v1431, %v1342
          %v1433 = vadd.f32 %v1432, %v1344
          %v1434 = vadd.f32 %v1433, %v1346
          %v1435 = vadd.f32 %v1434, %v1348
          %v1436 = vadd.f32 %v1435, %v1350
          %v1437 = vadd.f32 %v1436, %v1352
          %v1438 = vadd.f32 %v1437, %v1354
          %v1439 = vadd.f32 %v1438, %v1356
          %v1440 = vadd.f32 %v1439, %v1358
          %v1441 = vadd.f32 %v1440, %v1360
          %v1442 = vadd.f32 %v1441, %v1362
          %v1443 = vadd.f32 %v1442, %v1364
          %v1444 = vadd.f32 %v1443, %v1366
          %v1445 = vadd.f32 %v1444, %v1368
          %v1446 = vadd.f32 %v1445, %v1370
          %v1447 = vadd.f32 %v1446, %v1372
          %v1448 = vadd.f32 %v1447, %v1374
          %v1449 = vadd.f32 %v1448, %v1376
          %v1450 = vadd.f32 %v1449, %v1378
          %v1451 = vadd.f32 %v1450, %v1380
          %v1452 = vadd.f32 %v1451, %v1382
          %v1453 = vadd.f32 %v1452, %v1384
          %v1454 = vadd.f32 %v1453, %v1386
          %v1455 = vrot.slane %v1454, 4
          %v1456 = vadd.f32 %v1454, %v1455
          %v1457 = vrot.slane %v1456, 2
          %v1458 = vadd.f32 %v1456, %v1457
          %v1459 = vrot.slane %v1458, 1
          %v1460 = vadd.f32 %v1458, %v1459
          %v1461 = vadd.f32 %v1423, 0.0
          %v1462 = vadd.f32 %v1460, 0.0
          %v1463 = vmul.f32 %v1461, 0.00390625
          %v1464 = vmul.f32 %v1462, 0.00390625
          %v1465 = vpack.c.bf16 %v1463, %v1463
          %v1466 = vpack.c.bf16 %v1464, %v1464
          %1467 = vmatprep.subr.bf16.mxu0 %v1081
          %1468 = vmatpush1.bf16.msra.mxu0 %v1080
          %1469 = vmatprep.subr.bf16.mxu0 %v1079
          %1470 = vmatpush1.bf16.msra.mxu0 %v1078
          %1471 = vmatprep.subr.bf16.mxu0 %v1077
          %1472 = vmatpush1.bf16.msra.mxu0 %v1076
          %1473 = vmatprep.subr.bf16.mxu0 %v1075
          %1474 = vmatpush1.bf16.msra.mxu0 %v1074
          %1475 = vmatprep.subr.bf16.mxu0 %v1073
          %1476 = vmatpush1.bf16.msra.mxu0 %v1072
          %1477 = vmatprep.subr.bf16.mxu0 %v1071
          %1478 = vmatpush1.bf16.msra.mxu0 %v1070
          %1479 = vmatprep.subr.bf16.mxu0 %v1069
          %1480 = vmatpush1.bf16.msra.mxu0 %v1068
          %1481 = vmatprep.subr.bf16.mxu0 %v1067
          %1482 = vmatpush1.bf16.msra.mxu0 %v1066
          %1483 = vmatprep.subr.bf16.mxu0 %v1097
          %1484 = vmatpush2.bf16.msra.mxu0 %v1096
          %1485 = vmatprep.subr.bf16.mxu0 %v1095
          %1486 = vmatpush2.bf16.msra.mxu0 %v1094
          %1487 = vmatprep.subr.bf16.mxu0 %v1093
          %1488 = vmatpush2.bf16.msra.mxu0 %v1092
          %1489 = vmatprep.subr.bf16.mxu0 %v1091
          %1490 = vmatpush2.bf16.msra.mxu0 %v1090
          %1491 = vmatprep.subr.bf16.mxu0 %v1089
          %1492 = vmatpush2.bf16.msra.mxu0 %v1088
          %1493 = vmatprep.subr.bf16.mxu0 %v1087
          %1494 = vmatpush2.bf16.msra.mxu0 %v1086
          %1495 = vmatprep.subr.bf16.mxu0 %v1085
          %1496 = vmatpush2.bf16.msra.mxu0 %v1084
          %1497 = vmatprep.subr.bf16.mxu0 %v1083
          %1498 = vmatpush2.bf16.msra.mxu0 %v1082
          %1499 = vmatprep.mubr.bf16.mxu0 %v1466
          %1500 = vmatmul.mubr.bf16.gmra.mxu0 %v1465
          %v1501 = vpop.f32.mrf.mxu0
          %v1502 = vadd.f32 0.0, %v1501
          %v1503 = vpop.f32.mrf.mxu0
          %v1504 = vadd.f32 0.0, %v1503
          %v1505 = vpop.f32.mrf.mxu0
          %v1506 = vpop.f32.mrf.mxu0
          %1507 = vdwg.mxu0
          %v1508 = vmax.f32 %v1502, 0.0
          %v1509 = vmax.f32 %v1504, 0.0
          %v1510 = vadd.f32 %v1508, 1e-05
          %v1511 = vadd.f32 %v1509, 1e-05
          %v1512 = vrsqrt.pop %v1510
          %v1513 = vrsqrt.pop %v1511
          %v1515 = vlaneseq
          %v1516 = vshrl.u32 %v1515, 7
          %v1517 = vsub.s32 0, %v1516
          %v1518 = vrot.slane %v919, %v1517
          %v1519 = vlaneseq
          %v1520 = vshrl.u32 %v1519, 7
          %v1521 = vsub.s32 1, %v1520
          %v1522 = vrot.slane %v919, %v1521
          %v1525 = vmul.f32 %v1512, %v1518
          %v1526 = vmul.f32 %v1513, %v1522
          %v1527 = vmul.f32 %v1182, %v1525
          %v1528 = vmul.f32 %v1183, %v1526
          %v1531 = vcombine.low %v1527, %v1528
          %v1533 = vunpack.c.l.s4 1966171168
          %v1534 = vunpack.c.0.s8 %v1533
          %v1535 = vlaneseq
          %v1536 = vshrl.u32 %v1535, 7
          %v1537 = vsub.s32 %v1534, %v1536
          %v1538 = vrot.slane %v1531, %v1537
          %v1540 = vunpack.c.l.s4 1966171168
          %v1541 = vunpack.c.0.s8 %v1540
          %v1542 = vlaneseq
          %v1543 = vshrl.u32 %v1542, 7
          %v1544 = vsub.s32 %v1541, %v1543
          %v1545 = vrot.slane %v1538, %v1544
          %v1547 = vsub.f32 %v921, %v1545
          %v1548 = vlaneseq
          %v1549 = vshrl.u32 %v1548, 7
          %v1550 = vsub.s32 0, %v1549
          %v1551 = vrot.slane %v1525, %v1550
          %v1552 = vlaneseq
          %v1553 = vshrl.u32 %v1552, 7
          %v1554 = vsub.s32 0, %v1553
          %v1555 = vrot.slane %v1526, %v1554
          %v1556 = vmul.f32 %v1187, %v1551
          %v1557 = vmul.f32 %v1188, %v1555
          %v1558 = vmul.f32 %v1189, %v1551
          %v1559 = vmul.f32 %v1190, %v1555
          %v1560 = vmul.f32 %v1191, %v1551
          %v1561 = vmul.f32 %v1192, %v1555
          %v1562 = vmul.f32 %v1193, %v1551
          %v1563 = vmul.f32 %v1194, %v1555
          %v1564 = vmul.f32 %v1195, %v1551
          %v1565 = vmul.f32 %v1196, %v1555
          %v1566 = vmul.f32 %v1197, %v1551
          %v1567 = vmul.f32 %v1198, %v1555
          %v1568 = vmul.f32 %v1199, %v1551
          %v1569 = vmul.f32 %v1200, %v1555
          %v1570 = vmul.f32 %v1201, %v1551
          %v1571 = vmul.f32 %v1202, %v1555
          %v1572 = vmul.f32 %v1203, %v1551
          %v1573 = vmul.f32 %v1204, %v1555
          %v1574 = vmul.f32 %v1205, %v1551
          %v1575 = vmul.f32 %v1206, %v1555
          %v1576 = vmul.f32 %v1207, %v1551
          %v1577 = vmul.f32 %v1208, %v1555
          %v1578 = vmul.f32 %v1209, %v1551
          %v1579 = vmul.f32 %v1210, %v1555
          %v1580 = vmul.f32 %v1211, %v1551
          %v1581 = vmul.f32 %v1212, %v1555
          %v1582 = vmul.f32 %v1213, %v1551
          %v1583 = vmul.f32 %v1214, %v1555
          %v1584 = vmul.f32 %v1215, %v1551
          %v1585 = vmul.f32 %v1216, %v1555
          %v1586 = vmul.f32 %v1217, %v1551
          %v1587 = vmul.f32 %v1218, %v1555
          %v1588 = vmul.f32 %v1219, %v1551
          %v1589 = vmul.f32 %v1220, %v1555
          %v1590 = vmul.f32 %v1221, %v1551
          %v1591 = vmul.f32 %v1222, %v1555
          %v1592 = vmul.f32 %v1223, %v1551
          %v1593 = vmul.f32 %v1224, %v1555
          %v1594 = vmul.f32 %v1225, %v1551
          %v1595 = vmul.f32 %v1226, %v1555
          %v1596 = vmul.f32 %v1227, %v1551
          %v1597 = vmul.f32 %v1228, %v1555
          %v1598 = vmul.f32 %v1229, %v1551
          %v1599 = vmul.f32 %v1230, %v1555
          %v1600 = vmul.f32 %v1231, %v1551
          %v1601 = vmul.f32 %v1232, %v1555
          %v1602 = vmul.f32 %v1233, %v1551
          %v1603 = vmul.f32 %v1234, %v1555
          %v1604 = vmul.f32 %v1235, %v1551
          %v1605 = vmul.f32 %v1236, %v1555
          %v1606 = vmul.f32 %v1237, %v1551
          %v1607 = vmul.f32 %v1238, %v1555
          %v1608 = vmul.f32 %v1239, %v1551
          %v1609 = vmul.f32 %v1240, %v1555
          %v1610 = vmul.f32 %v1241, %v1551
          %v1611 = vmul.f32 %v1242, %v1555
          %v1612 = vmul.f32 %v1243, %v1551
          %v1613 = vmul.f32 %v1244, %v1555
          %v1614 = vmul.f32 %v1245, %v1551
          %v1615 = vmul.f32 %v1246, %v1555
          %v1616 = vmul.f32 %v1247, %v1551
          %v1617 = vmul.f32 %v1248, %v1555
          %v1618 = vmul.f32 %v1249, %v1551
          %v1619 = vmul.f32 %v1250, %v1555
          %v1621 = vlaneseq
          %v1622 = vshrl.u32 %v1621, 7
          %v1623 = vsub.s32 0, %v1622
          %v1624 = vrot.slane %v1547, %v1623
          %v1625 = vlaneseq
          %v1626 = vshrl.u32 %v1625, 7
          %v1627 = vsub.s32 1, %v1626
          %v1628 = vrot.slane %v1547, %v1627
          %v1631 = vadd.f32 %v1556, %v1624
          %v1632 = vadd.f32 %v1557, %v1628
          %v1633 = vadd.f32 %v1558, %v1624
          %v1634 = vadd.f32 %v1559, %v1628
          %v1635 = vadd.f32 %v1560, %v1624
          %v1636 = vadd.f32 %v1561, %v1628
          %v1637 = vadd.f32 %v1562, %v1624
          %v1638 = vadd.f32 %v1563, %v1628
          %v1639 = vadd.f32 %v1564, %v1624
          %v1640 = vadd.f32 %v1565, %v1628
          %v1641 = vadd.f32 %v1566, %v1624
          %v1642 = vadd.f32 %v1567, %v1628
          %v1643 = vadd.f32 %v1568, %v1624
          %v1644 = vadd.f32 %v1569, %v1628
          %v1645 = vadd.f32 %v1570, %v1624
          %v1646 = vadd.f32 %v1571, %v1628
          %v1647 = vadd.f32 %v1572, %v1624
          %v1648 = vadd.f32 %v1573, %v1628
          %v1649 = vadd.f32 %v1574, %v1624
          %v1650 = vadd.f32 %v1575, %v1628
          %v1651 = vadd.f32 %v1576, %v1624
          %v1652 = vadd.f32 %v1577, %v1628
          %v1653 = vadd.f32 %v1578, %v1624
          %v1654 = vadd.f32 %v1579, %v1628
          %v1655 = vadd.f32 %v1580, %v1624
          %v1656 = vadd.f32 %v1581, %v1628
          %v1657 = vadd.f32 %v1582, %v1624
          %v1658 = vadd.f32 %v1583, %v1628
          %v1659 = vadd.f32 %v1584, %v1624
          %v1660 = vadd.f32 %v1585, %v1628
          %v1661 = vadd.f32 %v1586, %v1624
          %v1662 = vadd.f32 %v1587, %v1628
          %v1663 = vadd.f32 %v1588, %v1624
          %v1664 = vadd.f32 %v1589, %v1628
          %v1665 = vadd.f32 %v1590, %v1624
          %v1666 = vadd.f32 %v1591, %v1628
          %v1667 = vadd.f32 %v1592, %v1624
          %v1668 = vadd.f32 %v1593, %v1628
          %v1669 = vadd.f32 %v1594, %v1624
          %v1670 = vadd.f32 %v1595, %v1628
          %v1671 = vadd.f32 %v1596, %v1624
          %v1672 = vadd.f32 %v1597, %v1628
          %v1673 = vadd.f32 %v1598, %v1624
          %v1674 = vadd.f32 %v1599, %v1628
          %v1675 = vadd.f32 %v1600, %v1624
          %v1676 = vadd.f32 %v1601, %v1628
          %v1677 = vadd.f32 %v1602, %v1624
          %v1678 = vadd.f32 %v1603, %v1628
          %v1679 = vadd.f32 %v1604, %v1624
          %v1680 = vadd.f32 %v1605, %v1628
          %v1681 = vadd.f32 %v1606, %v1624
          %v1682 = vadd.f32 %v1607, %v1628
          %v1683 = vadd.f32 %v1608, %v1624
          %v1684 = vadd.f32 %v1609, %v1628
          %v1685 = vadd.f32 %v1610, %v1624
          %v1686 = vadd.f32 %v1611, %v1628
          %v1687 = vadd.f32 %v1612, %v1624
          %v1688 = vadd.f32 %v1613, %v1628
          %v1689 = vadd.f32 %v1614, %v1624
          %v1690 = vadd.f32 %v1615, %v1628
          %v1691 = vadd.f32 %v1616, %v1624
          %v1692 = vadd.f32 %v1617, %v1628
          %v1693 = vadd.f32 %v1618, %v1624
          %v1694 = vadd.f32 %v1619, %v1628
          %v1695 = vpack.c.bf16 %v1633, %v1631
          %v1696 = vpack.c.bf16 %v1634, %v1632
          %v1697 = vpack.c.bf16 %v1637, %v1635
          %v1698 = vpack.c.bf16 %v1638, %v1636
          %v1699 = vpack.c.bf16 %v1641, %v1639
          %v1700 = vpack.c.bf16 %v1642, %v1640
          %v1701 = vpack.c.bf16 %v1645, %v1643
          %v1702 = vpack.c.bf16 %v1646, %v1644
          %v1703 = vpack.c.bf16 %v1649, %v1647
          %v1704 = vpack.c.bf16 %v1650, %v1648
          %v1705 = vpack.c.bf16 %v1653, %v1651
          %v1706 = vpack.c.bf16 %v1654, %v1652
          %v1707 = vpack.c.bf16 %v1657, %v1655
          %v1708 = vpack.c.bf16 %v1658, %v1656
          %v1709 = vpack.c.bf16 %v1661, %v1659
          %v1710 = vpack.c.bf16 %v1662, %v1660
          %v1711 = vpack.c.bf16 %v1665, %v1663
          %v1712 = vpack.c.bf16 %v1666, %v1664
          %v1713 = vpack.c.bf16 %v1669, %v1667
          %v1714 = vpack.c.bf16 %v1670, %v1668
          %v1715 = vpack.c.bf16 %v1673, %v1671
          %v1716 = vpack.c.bf16 %v1674, %v1672
          %v1717 = vpack.c.bf16 %v1677, %v1675
          %v1718 = vpack.c.bf16 %v1678, %v1676
          %v1719 = vpack.c.bf16 %v1681, %v1679
          %v1720 = vpack.c.bf16 %v1682, %v1680
          %v1721 = vpack.c.bf16 %v1685, %v1683
          %v1722 = vpack.c.bf16 %v1686, %v1684
          %v1723 = vpack.c.bf16 %v1689, %v1687
          %v1724 = vpack.c.bf16 %v1690, %v1688
          %v1725 = vpack.c.bf16 %v1693, %v1691
          %v1726 = vpack.c.bf16 %v1694, %v1692
          %v1759 = vunpack.c.l.b16 %v1695
          %v1760 = vunpack.c.l.b16 %v1696
          %v1761 = vunpack.c.h.b16 %v1695
          %v1762 = vunpack.c.h.b16 %v1696
          %v1763 = vunpack.c.l.b16 %v1697
          %v1764 = vunpack.c.l.b16 %v1698
          %v1765 = vunpack.c.h.b16 %v1697
          %v1766 = vunpack.c.h.b16 %v1698
          %v1767 = vunpack.c.l.b16 %v1699
          %v1768 = vunpack.c.l.b16 %v1700
          %v1769 = vunpack.c.h.b16 %v1699
          %v1770 = vunpack.c.h.b16 %v1700
          %v1771 = vunpack.c.l.b16 %v1701
          %v1772 = vunpack.c.l.b16 %v1702
          %v1773 = vunpack.c.h.b16 %v1701
          %v1774 = vunpack.c.h.b16 %v1702
          %v1775 = vunpack.c.l.b16 %v1703
          %v1776 = vunpack.c.l.b16 %v1704
          %v1777 = vunpack.c.h.b16 %v1703
          %v1778 = vunpack.c.h.b16 %v1704
          %v1779 = vunpack.c.l.b16 %v1705
          %v1780 = vunpack.c.l.b16 %v1706
          %v1781 = vunpack.c.h.b16 %v1705
          %v1782 = vunpack.c.h.b16 %v1706
          %v1783 = vunpack.c.l.b16 %v1707
          %v1784 = vunpack.c.l.b16 %v1708
          %v1785 = vunpack.c.h.b16 %v1707
          %v1786 = vunpack.c.h.b16 %v1708
          %v1787 = vunpack.c.l.b16 %v1709
          %v1788 = vunpack.c.l.b16 %v1710
          %v1789 = vunpack.c.h.b16 %v1709
          %v1790 = vunpack.c.h.b16 %v1710
          %v1791 = vunpack.c.l.b16 %v1711
          %v1792 = vunpack.c.l.b16 %v1712
          %v1793 = vunpack.c.h.b16 %v1711
          %v1794 = vunpack.c.h.b16 %v1712
          %v1795 = vunpack.c.l.b16 %v1713
          %v1796 = vunpack.c.l.b16 %v1714
          %v1797 = vunpack.c.h.b16 %v1713
          %v1798 = vunpack.c.h.b16 %v1714
          %v1799 = vunpack.c.l.b16 %v1715
          %v1800 = vunpack.c.l.b16 %v1716
          %v1801 = vunpack.c.h.b16 %v1715
          %v1802 = vunpack.c.h.b16 %v1716
          %v1803 = vunpack.c.l.b16 %v1717
          %v1804 = vunpack.c.l.b16 %v1718
          %v1805 = vunpack.c.h.b16 %v1717
          %v1806 = vunpack.c.h.b16 %v1718
          %v1807 = vunpack.c.l.b16 %v1719
          %v1808 = vunpack.c.l.b16 %v1720
          %v1809 = vunpack.c.h.b16 %v1719
          %v1810 = vunpack.c.h.b16 %v1720
          %v1811 = vunpack.c.l.b16 %v1721
          %v1812 = vunpack.c.l.b16 %v1722
          %v1813 = vunpack.c.h.b16 %v1721
          %v1814 = vunpack.c.h.b16 %v1722
          %v1815 = vunpack.c.l.b16 %v1723
          %v1816 = vunpack.c.l.b16 %v1724
          %v1817 = vunpack.c.h.b16 %v1723
          %v1818 = vunpack.c.h.b16 %v1724
          %v1819 = vunpack.c.l.b16 %v1725
          %v1820 = vunpack.c.l.b16 %v1726
          %v1821 = vunpack.c.h.b16 %v1725
          %v1822 = vunpack.c.h.b16 %v1726
          %v1823 = vpack.c.b16 %v1760, %v1759
          %v1824 = vpack.c.b16 %v1762, %v1761
          %v1825 = vpack.c.b16 %v1764, %v1763
          %v1826 = vpack.c.b16 %v1766, %v1765
          %v1827 = vpack.c.b16 %v1768, %v1767
          %v1828 = vpack.c.b16 %v1770, %v1769
          %v1829 = vpack.c.b16 %v1772, %v1771
          %v1830 = vpack.c.b16 %v1774, %v1773
          %v1831 = vpack.c.b16 %v1776, %v1775
          %v1832 = vpack.c.b16 %v1778, %v1777
          %v1833 = vpack.c.b16 %v1780, %v1779
          %v1834 = vpack.c.b16 %v1782, %v1781
          %v1835 = vpack.c.b16 %v1784, %v1783
          %v1836 = vpack.c.b16 %v1786, %v1785
          %v1837 = vpack.c.b16 %v1788, %v1787
          %v1838 = vpack.c.b16 %v1790, %v1789
          %v1839 = vpack.c.b16 %v1792, %v1791
          %v1840 = vpack.c.b16 %v1794, %v1793
          %v1841 = vpack.c.b16 %v1796, %v1795
          %v1842 = vpack.c.b16 %v1798, %v1797
          %v1843 = vpack.c.b16 %v1800, %v1799
          %v1844 = vpack.c.b16 %v1802, %v1801
          %v1845 = vpack.c.b16 %v1804, %v1803
          %v1846 = vpack.c.b16 %v1806, %v1805
          %v1847 = vpack.c.b16 %v1808, %v1807
          %v1848 = vpack.c.b16 %v1810, %v1809
          %v1849 = vpack.c.b16 %v1812, %v1811
          %v1850 = vpack.c.b16 %v1814, %v1813
          %v1851 = vpack.c.b16 %v1816, %v1815
          %v1852 = vpack.c.b16 %v1818, %v1817
          %v1853 = vpack.c.b16 %v1820, %v1819
          %v1854 = vpack.c.b16 %v1822, %v1821
          %s1887 = smul.addr %s1184, 4
          %s1888 = scalar_lea.vmem %s311, %s1887 [#allocation12]
          %1889 = vst [vmem:[%s1888] sm:$0xff] %v1823
          %1890 = vst [vmem:[%s1888 + $0x8] sm:$0xff] %v1824
          %1891 = vst [vmem:[%s1888 + $0x10] sm:$0xff] %v1825
          %1892 = vst [vmem:[%s1888 + $0x18] sm:$0xff] %v1826
          %1893 = vst [vmem:[%s1888 + $0x20] sm:$0xff] %v1827
          %1894 = vst [vmem:[%s1888 + $0x28] sm:$0xff] %v1828
          %1895 = vst [vmem:[%s1888 + $0x30] sm:$0xff] %v1829
          %1896 = vst [vmem:[%s1888 + $0x38] sm:$0xff] %v1830
          %1897 = vst [vmem:[%s1888 + $0x40] sm:$0xff] %v1831
          %1898 = vst [vmem:[%s1888 + $0x48] sm:$0xff] %v1832
          %1899 = vst [vmem:[%s1888 + $0x50] sm:$0xff] %v1833
          %1900 = vst [vmem:[%s1888 + $0x58] sm:$0xff] %v1834
          %1901 = vst [vmem:[%s1888 + $0x60] sm:$0xff] %v1835
          %1902 = vst [vmem:[%s1888 + $0x68] sm:$0xff] %v1836
          %1903 = vst [vmem:[%s1888 + $0x70] sm:$0xff] %v1837
          %1904 = vst [vmem:[%s1888 + $0x78] sm:$0xff] %v1838
          %1905 = vst [vmem:[%s1888 + $0x80] sm:$0xff] %v1839
          %1906 = vst [vmem:[%s1888 + $0x88] sm:$0xff] %v1840
          %1907 = vst [vmem:[%s1888 + $0x90] sm:$0xff] %v1841
          %1908 = vst [vmem:[%s1888 + $0x98] sm:$0xff] %v1842
          %1909 = vst [vmem:[%s1888 + $0xa0] sm:$0xff] %v1843
          %1910 = vst [vmem:[%s1888 + $0xa8] sm:$0xff] %v1844
          %1911 = vst [vmem:[%s1888 + $0xb0] sm:$0xff] %v1845
          %1912 = vst [vmem:[%s1888 + $0xb8] sm:$0xff] %v1846
          %1913 = vst [vmem:[%s1888 + $0xc0] sm:$0xff] %v1847
          %1914 = vst [vmem:[%s1888 + $0xc8] sm:$0xff] %v1848
          %1915 = vst [vmem:[%s1888 + $0xd0] sm:$0xff] %v1849
          %1916 = vst [vmem:[%s1888 + $0xd8] sm:$0xff] %v1850
          %1917 = vst [vmem:[%s1888 + $0xe0] sm:$0xff] %v1851
          %1918 = vst [vmem:[%s1888 + $0xe8] sm:$0xff] %v1852
          %1919 = vst [vmem:[%s1888 + $0xf0] sm:$0xff] %v1853
          %1920 = vst [vmem:[%s1888 + $0xf8] sm:$0xff] %v1854
        $region60: #{tpu_custom_call.1} parent=35 // pred_fallthru
          _
        %s1921 = sand.u32 %s160, 1
        %s1922 = scalar_lea.sflag [#allocation6], %s1921
        %s1923 = sand.u32 %s160, 1
        %s1924 = smul.addr %s1923, 256
        %s1925 = scalar_lea.vmem [#allocation12], %s1924
        // Predicated region
        $region61: #{tpu_custom_call.1} parent=35 // pred_check
          %p1926 = pneg %p170
        $region62: #{tpu_custom_call.1} parent=35 // pred_check_branch
          %1928 = sbr.rel (%p1926) target = $region64
        $region63: #{tpu_custom_call.1} parent=35 // pred_region
          %s1929 = smul.u32 2, %s29
          %s1931 = ssub.s32 4096, 4096
          %1932 = vsyncadd %s1922, %s1931
          %s1933 = smul.addr %s28, 64
          %s1934 = sadd.s32 %s1929, %s1933
          %s1935 = smul.addr %s1934, 64
          %s1936 = scalar_lea.hbm %s4, %s1935
          %s1937 = sshll.u32 %s1925, 4
          %s1938 = int_to_ptr.vmem [resolvable:$true] %s1937
          %1943 = dma.vmem_to_hbm [thread:$0]  %s1938, 4096, %s1936, %s1922, 128, 128, 8
        $region64: #{tpu_custom_call.1} parent=35 // pred_fallthru
          _
      $region36: #{tpu_custom_call.1} parent=5 // pred_fallthru
        _
      %p1944 = scmp.le.s32.totalorder 2, %s18
      // Predicated region
      $region65: #{tpu_custom_call.1} parent=5 // pred_check
        %p1945 = pneg %p1944
      $region66: #{tpu_custom_call.1} parent=5 // pred_check_branch
        %1947 = sbr.rel (%p1945) target = $region68
      $region67: #{tpu_custom_call.1} parent=5 // pred_region
        %s1948 = ssub.s32 %s18, 2
        // Predicated region
        $region69: #{tpu_custom_call.1} parent=67 // pred_check
          %p1949 = pneg %p176
        $region70: #{tpu_custom_call.1} parent=67 // pred_check_branch
          %1951 = sbr.rel (%p1949) target = $region72
        $region71: #{tpu_custom_call.1} parent=67 // pred_region
          %s1952 = sand.u32 %s161, 1
          %s1953 = scalar_lea.sflag [#allocation6], %s1952
          %s1954 = sand.u32 %s161, 1
          %s1955 = smul.addr %s1954, 256
          %s1956 = scalar_lea.vmem [#allocation12], %s1955
          %1957 = dma.done %s1953, 4096
        $region72: #{tpu_custom_call.1} parent=67 // pred_fallthru
          _
      $region68: #{tpu_custom_call.1} parent=5 // pred_fallthru
        _
    $region6: #{tpu_custom_call.1} parent=1 // loop_footer
      %s22 = sadd.s32 1, %s18
    $region7: #{tpu_custom_call.1} parent=1 // loop_footer_branch
      %17 = sbr.rel target = $region3
    $region8: #{tpu_custom_call.1} parent=1 // loop_exit
      _
    %1958 = vsyncpa [#allocation5], 1
    %s1959 = scalar_lea.sflag [#allocation5], 1
    %1960 = vsyncpa %s1959, 1
    %1961 = vsyncpa [#allocation8], 1
    %1962 = vsyncpa [#allocation11], 1
    %1963 = vsyncpa [#allocation6], 1
    %s1964 = scalar_lea.sflag [#allocation6], 1
    %1965 = vsyncpa %s1964, 1

</llo_original>
